<compile_context>
chip_gen: v5e
topology: v5e:2x2
jax: 0.10.0
libtpu: 0.0.40
codegen_flags: <defaults>
</compile_context>

<pallas_src>
import functools

import numpy as np

import jax
import jax.numpy as jnp
from jax import lax
from jax.experimental import pallas as pl
from jax.experimental.pallas import tpu as pltpu


# ----------------------------------------------------------------------------
# Network geometry (matches the PyTorch module)
# ----------------------------------------------------------------------------
_CONV_DEFS = ((16, 8, 4), (32, 4, 2), (32, 3, 1))   # (out_channels, kernel, stride)
_LN_EPS = 1e-5


def _conv_out(size, k, stride):
    return (size - k) // stride + 1


def make_config(observation_space, action_space, hidden_fc_dim, batch):
    width, height, frames = observation_space
    convs = []
    h, w, cin = height, width, frames
    for cout, k, s in _CONV_DEFS:
        ho, wo = _conv_out(h, k, s), _conv_out(w, k, s)
        assert ho > 0 and wo > 0, "observation too small for the conv stack"
        convs.append(dict(k=k, stride=s, cin=cin, cout=cout,
                          h_in=h, w_in=w, h_out=ho, w_out=wo))
        h, w, cin = ho, wo, cout
    return dict(batch=batch, height=height, width=width, frames=frames,
                convs=tuple(convs), conv_flat=h * w * cin,
                hidden=hidden_fc_dim, action=action_space)


# ----------------------------------------------------------------------------
# Fused Pallas kernel: whole ActorCNN forward at one (gridless) call
# ----------------------------------------------------------------------------
def _conv_stage(act_ref, lhs_ref, w_ref, b_ref, *, batch, k, stride, h_out):
    """Banded conv as k accumulating matmuls with output rows stacked in M.

    act_ref : (h_in*B,  w_in*cin)   f32 scratch, rows ordered (h, b)
    lhs_ref : (h_out*B, w_in*cin)   f32 scratch used to assemble the per-ky LHS
    w_ref   : (k, w_in*cin, w_out*cout) bf16 banded weight
    b_ref   : (1, w_out*cout)       f32 bias tiled over output width
    returns : (h_out*B, w_out*cout) f32, post bias + ReLU
    """
    acc = None
    for ky in range(k):
        if h_out == 1:
            # single output row: the LHS is one contiguous B-row slab.
            lhs = act_ref[ky * batch:(ky + 1) * batch, :]
        else:
            # stack rows (stride*oh + ky, b) for all oh into the M dimension
            # via static-slice VMEM copies (no strided gathers / reshapes).
            for oh in range(h_out):
                src = (stride * oh + ky) * batch
                lhs_ref[oh * batch:(oh + 1) * batch, :] = act_ref[src:src + batch, :]
            lhs = lhs_ref[...]
        part = jnp.dot(lhs.astype(jnp.bfloat16), w_ref[ky],
                       preferred_element_type=jnp.float32)
        acc = part if acc is None else acc + part        # one accumulator per layer
    return jnp.maximum(acc + b_ref[...], 0.0)            # fused bias + ReLU


def _layer_norm_relu(v, g_ref, b_ref):
    mean = jnp.mean(v, axis=-1, keepdims=True)
    c = v - mean                                          # two-pass LN (torch numerics)
    var = jnp.mean(c * c, axis=-1, keepdims=True)
    vn = c * lax.rsqrt(var + _LN_EPS)
    return jnp.maximum(vn * g_ref[...] + b_ref[...], 0.0)


def _actor_kernel(xl_ref,
                  w1_ref, b1_ref, w2_ref, b2_ref, w3_ref, b3_ref,
                  fc1w_ref, fc1b_ref, ln1g_ref, ln1b_ref,
                  fc2w_ref, fc2b_ref, ln2g_ref, ln2b_ref,
                  fc3w_ref, fc3b_ref,
                  out_ref,
                  act1_ref, lhs2_ref, act2_ref, lhs3_ref,
                  *, geom):
    B = geom["batch"]
    k2, s2, h2o = geom["conv2"]
    k3, s3, h3o = geom["conv3"]

    # conv1 + ReLU: ONE folded-K matmul (im2row LHS built in the wrapper).
    z1 = jnp.dot(xl_ref[...], w1_ref[...], preferred_element_type=jnp.float32)
    act1_ref[...] = jnp.maximum(z1 + b1_ref[...], 0.0)

    # conv2 + ReLU: k2 accumulating matmuls, all output rows stacked in M.
    act2_ref[...] = _conv_stage(act1_ref, lhs2_ref, w2_ref, b2_ref,
                                batch=B, k=k2, stride=s2, h_out=h2o)

    # conv3 + ReLU.
    act3 = _conv_stage(act2_ref, lhs3_ref, w3_ref, b3_ref,
                       batch=B, k=k3, stride=s3, h_out=h3o)

    # Flatten to (B, conv_flat) in NHWC order; PyTorch's NCHW channel-major
    # flatten is folded into fc1's weight rows at prep time.
    if h3o == 1:
        h = act3
    else:
        # TODO(synk): lane-concat flatten path is not exercised by the 36x36x4
        # config (h3_out == 1); order matches the fc1 permutation but forces
        # lane-offset relayouts on other geometries.
        h = jnp.concatenate([act3[oh * B:(oh + 1) * B, :] for oh in range(h3o)],
                            axis=1)

    # fc1 + LayerNorm + ReLU, fc2 + LayerNorm + ReLU, fc3 + tanh.
    h = jnp.dot(h.astype(jnp.bfloat16), fc1w_ref[...],
                preferred_element_type=jnp.float32) + fc1b_ref[...]
    h = _layer_norm_relu(h, ln1g_ref, ln1b_ref)
    h = jnp.dot(h.astype(jnp.bfloat16), fc2w_ref[...],
                preferred_element_type=jnp.float32) + fc2b_ref[...]
    h = _layer_norm_relu(h, ln2g_ref, ln2b_ref)
    h = jnp.dot(h.astype(jnp.bfloat16), fc3w_ref[...],
                preferred_element_type=jnp.float32) + fc3b_ref[...]
    out_ref[...] = jnp.tanh(h).astype(out_ref.dtype)


def make_actor_forward(cfg):
    c1, c2, c3 = cfg["convs"]
    B = cfg["batch"]
    geom = dict(batch=B,
                conv2=(c2["k"], c2["stride"], c2["h_out"]),
                conv3=(c3["k"], c3["stride"], c3["h_out"]))
    kernel = functools.partial(_actor_kernel, geom=geom)
    vmem = pl.BlockSpec(memory_space=pltpu.MemorySpace.VMEM)

    k1, s1, h1o = c1["k"], c1["stride"], c1["h_out"]
    n1 = c1["w_out"] * c1["cout"]            # conv1 output row width (lanes)
    n2 = c2["w_out"] * c2["cout"]

    scratch_shapes = [
        pltpu.VMEM((c1["h_out"] * B, n1), jnp.float32),   # act1 (conv1 output rows)
        pltpu.VMEM((c2["h_out"] * B, n1), jnp.float32),   # conv2 LHS assembly
        pltpu.VMEM((c2["h_out"] * B, n2), jnp.float32),   # act2 (conv2 output rows)
        pltpu.VMEM((c3["h_out"] * B, n2), jnp.float32),   # conv3 LHS assembly
    ]

    # Static cost hint (kernel is DMA/latency bound at this size).
    flops = 0
    for c in cfg["convs"]:
        flops += 2 * B * c["h_out"] * c["k"] * (c["w_in"] * c["cin"]) * (c["w_out"] * c["cout"])
    flops += 2 * B * (cfg["conv_flat"] * cfg["hidden"]
                      + cfg["hidden"] * cfg["hidden"]
                      + cfg["hidden"] * cfg["action"])

    def forward(x_nhwc, ops):
        Bx, H, W, F = x_nhwc.shape
        # im2row for conv1 (layout plumbing only, fused by XLA).  Rows are
        # (oh, b), columns (ky, w, f).  bf16 keeps the DMA'd LHS smaller than
        # the raw f32 observation.
        xr = jnp.transpose(x_nhwc, (1, 0, 2, 3))                       # (H, B, W, F)
        win = jnp.stack([xr[s1 * oh: s1 * oh + k1] for oh in range(h1o)], axis=0)
        xl = jnp.transpose(win, (0, 2, 1, 3, 4)).reshape(h1o * Bx, k1 * W * F)
        xl = xl.astype(jnp.bfloat16)

        operands = (
            xl,
            ops["w1"], ops["b1"], ops["w2"], ops["b2"], ops["w3"], ops["b3"],
            ops["fc1_w"], ops["fc1_b"], ops["ln1_g"], ops["ln1_b"],
            ops["fc2_w"], ops["fc2_b"], ops["ln2_g"], ops["ln2_b"],
            ops["fc3_w"], ops["fc3_b"],
        )
        bytes_accessed = sum(int(np.prod(o.shape)) * o.dtype.itemsize for o in operands)
        bytes_accessed += Bx * cfg["action"] * 4
        return pl.pallas_call(
            kernel,
            out_shape=jax.ShapeDtypeStruct((Bx, cfg["action"]), jnp.float32),
            in_specs=[vmem] * len(operands),
            out_specs=vmem,
            scratch_shapes=scratch_shapes,
            cost_estimate=pl.CostEstimate(
                flops=int(flops),
                transcendentals=int(B * (cfg["action"] + 4)),
                bytes_accessed=int(bytes_accessed)),
        )(*operands)

    # NOTE: at batch=2 a single gridless call is optimal (whole net < 1 MiB of
    # VMEM on every generation, incl. v7x's 64 MiB).  Only if the batch grows
    # (vectorized envs, B >= ~128) add a leading 'parallel' grid axis over
    # batch rows so both v7x TensorCores get work; today it would only add
    # per-step overhead and duplicate weight DMA.
    return jax.jit(forward)


# ----------------------------------------------------------------------------
# One-time parameter preparation (static glue, outside the hot path)
# ----------------------------------------------------------------------------
def _banded_conv_weight(w_oihw, w_in, w_out, stride, *, fold_k):
    """(Cout,Cin,K,K) torch weight -> banded matmul weight (bf16).

    fold_k=False: (K, W_in*Cin, W_out*Cout)  per-ky accumulation form.
    fold_k=True : (K*W_in*Cin, W_out*Cout)   single-matmul (folded-K) form.
    Rows ordered (ky, w, cin); columns ordered (w_out, cout).
    """
    w = np.asarray(jax.device_get(w_oihw), np.float32)
    cout, cin, k, _ = w.shape
    w_k = np.transpose(w, (2, 3, 1, 0))                       # (ky, kx, cin, cout)
    mats = np.zeros((k, w_in * cin, w_out * cout), np.float32)
    for ky in range(k):
        block = w_k[ky].reshape(k * cin, cout)                # rows (kx, cin)
        for ow in range(w_out):
            mats[ky, ow * stride * cin:(ow * stride + k) * cin,
                 ow * cout:(ow + 1) * cout] = block
    if fold_k:
        mats = mats.reshape(k * w_in * cin, w_out * cout)
    return jnp.asarray(mats, dtype=jnp.bfloat16)


def prepare_operands(params, cfg):
    c1, c2, c3 = cfg["convs"]
    f32 = jnp.float32

    def bias_tile(b, w_out):
        return jnp.tile(b, w_out).reshape(1, -1).astype(f32)

    ops = {
        "w1": _banded_conv_weight(params["conv1_w"], c1["w_in"], c1["w_out"],
                                  c1["stride"], fold_k=True),
        "b1": bias_tile(params["conv1_b"], c1["w_out"]),
        "w2": _banded_conv_weight(params["conv2_w"], c2["w_in"], c2["w_out"],
                                  c2["stride"], fold_k=False),
        "b2": bias_tile(params["conv2_b"], c2["w_out"]),
        "w3": _banded_conv_weight(params["conv3_w"], c3["w_in"], c3["w_out"],
                                  c3["stride"], fold_k=False),
        "b3": bias_tile(params["conv3_b"], c3["w_out"]),
    }
    # Fold PyTorch's NCHW channel-major flatten into fc1's rows (the kernel
    # keeps NHWC order per batch row).
    h3, w3, ch3 = c3["h_out"], c3["w_out"], c3["cout"]
    perm = np.asarray([c * (h3 * w3) + hh * w3 + ww
                       for hh in range(h3) for ww in range(w3) for c in range(ch3)],
                      dtype=np.int32)
    ops["fc1_w"] = params["fc1_w"][perm, :].astype(jnp.bfloat16)
    ops["fc1_b"] = params["fc1_b"].reshape(1, -1).astype(f32)
    ops["ln1_g"] = params["ln1_g"].reshape(1, -1).astype(f32)
    ops["ln1_b"] = params["ln1_b"].reshape(1, -1).astype(f32)
    ops["fc2_w"] = params["fc2_w"].astype(jnp.bfloat16)
    ops["fc2_b"] = params["fc2_b"].reshape(1, -1).astype(f32)
    ops["ln2_g"] = params["ln2_g"].reshape(1, -1).astype(f32)
    ops["ln2_b"] = params["ln2_b"].reshape(1, -1).astype(f32)
    ops["fc3_w"] = params["fc3_w"].astype(jnp.bfloat16)
    ops["fc3_b"] = params["fc3_b"].reshape(1, -1).astype(f32)
    return ops


def init_params(key, cfg):
    """Synthetic torch-style init: U(+-1/sqrt(fan_in)), small last layer."""
    frames, hidden, action = cfg["frames"], cfg["hidden"], cfg["action"]
    conv_flat = cfg["conv_flat"]

    def uni(k, shape, fan_in):
        bound = 1.0 / np.sqrt(float(fan_in))
        return jax.random.uniform(k, shape, jnp.float32, -bound, bound)

    ks = jax.random.split(key, 12)
    return {
        "conv1_w": uni(ks[0], (16, frames, 8, 8), frames * 64),
        "conv1_b": uni(ks[1], (16,), frames * 64),
        "conv2_w": uni(ks[2], (32, 16, 4, 4), 16 * 16),
        "conv2_b": uni(ks[3], (32,), 16 * 16),
        "conv3_w": uni(ks[4], (32, 32, 3, 3), 32 * 9),
        "conv3_b": uni(ks[5], (32,), 32 * 9),
        "fc1_w": uni(ks[6], (conv_flat, hidden), conv_flat),   # rows in NCHW-flatten order
        "fc1_b": uni(ks[7], (hidden,), conv_flat),
        "ln1_g": jnp.ones((hidden,), jnp.float32),
        "ln1_b": jnp.zeros((hidden,), jnp.float32),
        "fc2_w": uni(ks[8], (hidden, hidden), hidden),
        "fc2_b": uni(ks[9], (hidden,), hidden),
        "ln2_g": jnp.ones((hidden,), jnp.float32),
        "ln2_b": jnp.zeros((hidden,), jnp.float32),
        "fc3_w": 3e-3 * uni(ks[10], (hidden, action), hidden),  # init_weights(last_layer=True)
        "fc3_b": 3e-3 * uni(ks[11], (action,), hidden),
    }


# ----------------------------------------------------------------------------
# Pure-XLA reference of the PyTorch module (validation only)
# ----------------------------------------------------------------------------
def reference_forward(x_nhwc, params):
    x = jnp.transpose(x_nhwc, (0, 3, 1, 2))                  # NCHW, as torch forward() does

    def conv_relu(x, w, b, s):
        y = lax.conv_general_dilated(
            x, w, window_strides=(s, s), padding="VALID",
            dimension_numbers=("NCHW", "OIHW", "NCHW"),
            precision=lax.Precision.HIGHEST)
        return jnp.maximum(y + b[None, :, None, None], 0.0)

    x = conv_relu(x, params["conv1_w"], params["conv1_b"], 4)
    x = conv_relu(x, params["conv2_w"], params["conv2_b"], 2)
    x = conv_relu(x, params["conv3_w"], params["conv3_b"], 1)
    h = x.reshape(x.shape[0], -1)                            # nn.Flatten on NCHW

    def ln(v, g, b):
        m = jnp.mean(v, -1, keepdims=True)
        var = jnp.mean((v - m) ** 2, -1, keepdims=True)
        return (v - m) * lax.rsqrt(var + _LN_EPS) * g + b

    h = jnp.dot(h, params["fc1_w"], precision=lax.Precision.HIGHEST) + params["fc1_b"]
    h = jnp.maximum(ln(h, params["ln1_g"], params["ln1_b"]), 0.0)
    h = jnp.dot(h, params["fc2_w"], precision=lax.Precision.HIGHEST) + params["fc2_b"]
    h = jnp.maximum(ln(h, params["ln2_g"], params["ln2_b"]), 0.0)
    h = jnp.dot(h, params["fc3_w"], precision=lax.Precision.HIGHEST) + params["fc3_b"]
    return jnp.tanh(h)


if __name__ == "__main__":
    action_space = 4
    observation_space = (36, 36, 4)          # (width, height, frames): smallest valid for k8s4->k4s2->k3s1
    hidden_fc_dim = 128
    batch = 2

    cfg = make_config(observation_space, action_space, hidden_fc_dim, batch)

    key = jax.random.PRNGKey(0)
    kp, kx = jax.random.split(key)
    params = init_params(kp, cfg)
    ops = prepare_operands(params, cfg)

    width, height, frames = observation_space
    x = jax.random.uniform(kx, (batch, height, width, frames), jnp.float32)

    forward = make_actor_forward(cfg)
    out = jax.block_until_ready(forward(x, ops))

    assert out.shape == (batch, action_space), out.shape
    assert bool(jnp.all(jnp.isfinite(out)))
    assert bool(jnp.all(jnp.abs(out) <= 1.0 + 1e-6))         # tanh range

    # Cross-check against a pure-XLA (f32, HIGHEST precision) reference of the
    # module.  The kernel deliberately stores matmul weights in bf16 with f32
    # accumulation (single-pass MXU), so the tolerance allows for that.
    ref = jax.block_until_ready(jax.jit(reference_forward)(x, params))
    np.testing.assert_allclose(np.asarray(out), np.asarray(ref), rtol=2e-2, atol=5e-4)

    print("KERNEL_OK")
</pallas_src>

<mosaic_0001>
module attributes {stable_mosaic.version = 11 : i64} {
  func.func @_actor_kernel(%arg0: memref<16x1152xbf16, #tpu.memory_space<vmem>>, %arg1: memref<1152x128xbf16, #tpu.memory_space<vmem>>, %arg2: memref<1x128xf32, #tpu.memory_space<vmem>>, %arg3: memref<4x128x96xbf16, #tpu.memory_space<vmem>>, %arg4: memref<1x96xf32, #tpu.memory_space<vmem>>, %arg5: memref<3x96x32xbf16, #tpu.memory_space<vmem>>, %arg6: memref<1x32xf32, #tpu.memory_space<vmem>>, %arg7: memref<32x128xbf16, #tpu.memory_space<vmem>>, %arg8: memref<1x128xf32, #tpu.memory_space<vmem>>, %arg9: memref<1x128xf32, #tpu.memory_space<vmem>>, %arg10: memref<1x128xf32, #tpu.memory_space<vmem>>, %arg11: memref<128x128xbf16, #tpu.memory_space<vmem>>, %arg12: memref<1x128xf32, #tpu.memory_space<vmem>>, %arg13: memref<1x128xf32, #tpu.memory_space<vmem>>, %arg14: memref<1x128xf32, #tpu.memory_space<vmem>>, %arg15: memref<128x4xbf16, #tpu.memory_space<vmem>>, %arg16: memref<1x4xf32, #tpu.memory_space<vmem>>, %arg17: memref<2x4xf32, #tpu.memory_space<vmem>>, %arg18: memref<16x128xf32, #tpu.memory_space<vmem>>, %arg19: memref<6x128xf32, #tpu.memory_space<vmem>>, %arg20: memref<6x96xf32, #tpu.memory_space<vmem>>, %arg21: memref<2x96xf32, #tpu.memory_space<vmem>>) attributes {dimension_semantics = [], scalar_prefetch = 0 : i64, scratch_operands = 4 : i64, tpu.core_type = #tpu.core_type<tc>} {
    %c0 = arith.constant 0 : index
    %c0_0 = arith.constant 0 : index
    %0 = vector.load %arg0[%c0, %c0_0] : memref<16x1152xbf16, #tpu.memory_space<vmem>>, vector<16x1152xbf16>
    %c0_1 = arith.constant 0 : index
    %c0_2 = arith.constant 0 : index
    %1 = vector.load %arg1[%c0_1, %c0_2] : memref<1152x128xbf16, #tpu.memory_space<vmem>>, vector<1152x128xbf16>
    %cst = arith.constant dense<0.000000e+00> : vector<16x128xf32>
    %2 = tpu.matmul %0, %1, %cst {dimension_numbers = #tpu.dot_dimension_numbers<[1], [0], [0], [1], [0, 0, 1, 1], [], []>} : vector<16x1152xbf16>, vector<1152x128xbf16>, vector<16x128xf32> -> vector<16x128xf32>
    %c0_3 = arith.constant 0 : index
    %c0_4 = arith.constant 0 : index
    %3 = vector.load %arg2[%c0_3, %c0_4] : memref<1x128xf32, #tpu.memory_space<vmem>>, vector<1x128xf32>
    %4 = vector.broadcast %3 : vector<1x128xf32> to vector<16x128xf32>
    %5 = arith.addf %2, %4 : vector<16x128xf32>
    %cst_5 = arith.constant 0.000000e+00 : f32
    %6 = vector.broadcast %cst_5 : f32 to vector<16x128xf32>
    %7 = arith.maximumf %5, %6 : vector<16x128xf32>
    %c0_6 = arith.constant 0 : index
    %c0_7 = arith.constant 0 : index
    %8 = vector.load %arg18[%c0_6, %c0_7] : memref<16x128xf32, #tpu.memory_space<vmem>>, vector<16x128xf32>
    tpu.vector_store %arg18[%c0_6, %c0_7], %7 {strides = array<i32>} : memref<16x128xf32, #tpu.memory_space<vmem>>, vector<16x128xf32>,
    %c0_8 = arith.constant 0 : index
    %c0_9 = arith.constant 0 : index
    %9 = vector.load %arg18[%c0_8, %c0_9] : memref<16x128xf32, #tpu.memory_space<vmem>>, vector<2x128xf32>
    %c0_10 = arith.constant 0 : index
    %c0_11 = arith.constant 0 : index
    %10 = vector.load %arg19[%c0_10, %c0_11] : memref<6x128xf32, #tpu.memory_space<vmem>>, vector<2x128xf32>
    tpu.vector_store %arg19[%c0_10, %c0_11], %9 {strides = array<i32>} : memref<6x128xf32, #tpu.memory_space<vmem>>, vector<2x128xf32>,
    %c4 = arith.constant 4 : index
    %c0_12 = arith.constant 0 : index
    %11 = vector.load %arg18[%c4, %c0_12] : memref<16x128xf32, #tpu.memory_space<vmem>>, vector<2x128xf32>
    %c2 = arith.constant 2 : index
    %c0_13 = arith.constant 0 : index
    %12 = vector.load %arg19[%c2, %c0_13] : memref<6x128xf32, #tpu.memory_space<vmem>>, vector<2x128xf32>
    tpu.vector_store %arg19[%c2, %c0_13], %11 {strides = array<i32>} : memref<6x128xf32, #tpu.memory_space<vmem>>, vector<2x128xf32>,
    %c8 = arith.constant 8 : index
    %c0_14 = arith.constant 0 : index
    %13 = vector.load %arg18[%c8, %c0_14] : memref<16x128xf32, #tpu.memory_space<vmem>>, vector<2x128xf32>
    %c4_15 = arith.constant 4 : index
    %c0_16 = arith.constant 0 : index
    %14 = vector.load %arg19[%c4_15, %c0_16] : memref<6x128xf32, #tpu.memory_space<vmem>>, vector<2x128xf32>
    tpu.vector_store %arg19[%c4_15, %c0_16], %13 {strides = array<i32>} : memref<6x128xf32, #tpu.memory_space<vmem>>, vector<2x128xf32>,
    %c0_17 = arith.constant 0 : index
    %c0_18 = arith.constant 0 : index
    %15 = vector.load %arg19[%c0_17, %c0_18] : memref<6x128xf32, #tpu.memory_space<vmem>>, vector<6x128xf32>
    %16 = arith.truncf %15 : vector<6x128xf32> to vector<6x128xbf16>
    %c0_19 = arith.constant 0 : index
    %c0_20 = arith.constant 0 : index
    %c0_21 = arith.constant 0 : index
    %17 = vector.load %arg3[%c0_19, %c0_20, %c0_21] : memref<4x128x96xbf16, #tpu.memory_space<vmem>>, vector<1x128x96xbf16>
    %18 = vector.shape_cast %17 : vector<1x128x96xbf16> to vector<128x96xbf16>
    %cst_22 = arith.constant dense<0.000000e+00> : vector<6x96xf32>
    %19 = tpu.matmul %16, %18, %cst_22 {dimension_numbers = #tpu.dot_dimension_numbers<[1], [0], [0], [1], [0, 0, 1, 1], [], []>} : vector<6x128xbf16>, vector<128x96xbf16>, vector<6x96xf32> -> vector<6x96xf32>
    %c2_23 = arith.constant 2 : index
    %c0_24 = arith.constant 0 : index
    %20 = vector.load %arg18[%c2_23, %c0_24] : memref<16x128xf32, #tpu.memory_space<vmem>>, vector<2x128xf32>
    %c0_25 = arith.constant 0 : index
    %c0_26 = arith.constant 0 : index
    %21 = vector.load %arg19[%c0_25, %c0_26] : memref<6x128xf32, #tpu.memory_space<vmem>>, vector<2x128xf32>
    tpu.vector_store %arg19[%c0_25, %c0_26], %20 {strides = array<i32>} : memref<6x128xf32, #tpu.memory_space<vmem>>, vector<2x128xf32>,
    %c6 = arith.constant 6 : index
    %c0_27 = arith.constant 0 : index
    %22 = vector.load %arg18[%c6, %c0_27] : memref<16x128xf32, #tpu.memory_space<vmem>>, vector<2x128xf32>
    %c2_28 = arith.constant 2 : index
    %c0_29 = arith.constant 0 : index
    %23 = vector.load %arg19[%c2_28, %c0_29] : memref<6x128xf32, #tpu.memory_space<vmem>>, vector<2x128xf32>
    tpu.vector_store %arg19[%c2_28, %c0_29], %22 {strides = array<i32>} : memref<6x128xf32, #tpu.memory_space<vmem>>, vector<2x128xf32>,
    %c10 = arith.constant 10 : index
    %c0_30 = arith.constant 0 : index
    %24 = vector.load %arg18[%c10, %c0_30] : memref<16x128xf32, #tpu.memory_space<vmem>>, vector<2x128xf32>
    %c4_31 = arith.constant 4 : index
    %c0_32 = arith.constant 0 : index
    %25 = vector.load %arg19[%c4_31, %c0_32] : memref<6x128xf32, #tpu.memory_space<vmem>>, vector<2x128xf32>
    tpu.vector_store %arg19[%c4_31, %c0_32], %24 {strides = array<i32>} : memref<6x128xf32, #tpu.memory_space<vmem>>, vector<2x128xf32>,
    %c0_33 = arith.constant 0 : index
    %c0_34 = arith.constant 0 : index
    %26 = vector.load %arg19[%c0_33, %c0_34] : memref<6x128xf32, #tpu.memory_space<vmem>>, vector<6x128xf32>
    %27 = arith.truncf %26 : vector<6x128xf32> to vector<6x128xbf16>
    %c1 = arith.constant 1 : index
    %c0_35 = arith.constant 0 : index
    %c0_36 = arith.constant 0 : index
    %28 = vector.load %arg3[%c1, %c0_35, %c0_36] : memref<4x128x96xbf16, #tpu.memory_space<vmem>>, vector<1x128x96xbf16>
    %29 = vector.shape_cast %28 : vector<1x128x96xbf16> to vector<128x96xbf16>
    %cst_37 = arith.constant dense<0.000000e+00> : vector<6x96xf32>
    %30 = tpu.matmul %27, %29, %cst_37 {dimension_numbers = #tpu.dot_dimension_numbers<[1], [0], [0], [1], [0, 0, 1, 1], [], []>} : vector<6x128xbf16>, vector<128x96xbf16>, vector<6x96xf32> -> vector<6x96xf32>
    %31 = arith.addf %19, %30 : vector<6x96xf32>
    %c4_38 = arith.constant 4 : index
    %c0_39 = arith.constant 0 : index
    %32 = vector.load %arg18[%c4_38, %c0_39] : memref<16x128xf32, #tpu.memory_space<vmem>>, vector<2x128xf32>
    %c0_40 = arith.constant 0 : index
    %c0_41 = arith.constant 0 : index
    %33 = vector.load %arg19[%c0_40, %c0_41] : memref<6x128xf32, #tpu.memory_space<vmem>>, vector<2x128xf32>
    tpu.vector_store %arg19[%c0_40, %c0_41], %32 {strides = array<i32>} : memref<6x128xf32, #tpu.memory_space<vmem>>, vector<2x128xf32>,
    %c8_42 = arith.constant 8 : index
    %c0_43 = arith.constant 0 : index
    %34 = vector.load %arg18[%c8_42, %c0_43] : memref<16x128xf32, #tpu.memory_space<vmem>>, vector<2x128xf32>
    %c2_44 = arith.constant 2 : index
    %c0_45 = arith.constant 0 : index
    %35 = vector.load %arg19[%c2_44, %c0_45] : memref<6x128xf32, #tpu.memory_space<vmem>>, vector<2x128xf32>
    tpu.vector_store %arg19[%c2_44, %c0_45], %34 {strides = array<i32>} : memref<6x128xf32, #tpu.memory_space<vmem>>, vector<2x128xf32>,
    %c12 = arith.constant 12 : index
    %c0_46 = arith.constant 0 : index
    %36 = vector.load %arg18[%c12, %c0_46] : memref<16x128xf32, #tpu.memory_space<vmem>>, vector<2x128xf32>
    %c4_47 = arith.constant 4 : index
    %c0_48 = arith.constant 0 : index
    %37 = vector.load %arg19[%c4_47, %c0_48] : memref<6x128xf32, #tpu.memory_space<vmem>>, vector<2x128xf32>
    tpu.vector_store %arg19[%c4_47, %c0_48], %36 {strides = array<i32>} : memref<6x128xf32, #tpu.memory_space<vmem>>, vector<2x128xf32>,
    %c0_49 = arith.constant 0 : index
    %c0_50 = arith.constant 0 : index
    %38 = vector.load %arg19[%c0_49, %c0_50] : memref<6x128xf32, #tpu.memory_space<vmem>>, vector<6x128xf32>
    %39 = arith.truncf %38 : vector<6x128xf32> to vector<6x128xbf16>
    %c2_51 = arith.constant 2 : index
    %c0_52 = arith.constant 0 : index
    %c0_53 = arith.constant 0 : index
    %40 = vector.load %arg3[%c2_51, %c0_52, %c0_53] : memref<4x128x96xbf16, #tpu.memory_space<vmem>>, vector<1x128x96xbf16>
    %41 = vector.shape_cast %40 : vector<1x128x96xbf16> to vector<128x96xbf16>
    %cst_54 = arith.constant dense<0.000000e+00> : vector<6x96xf32>
    %42 = tpu.matmul %39, %41, %cst_54 {dimension_numbers = #tpu.dot_dimension_numbers<[1], [0], [0], [1], [0, 0, 1, 1], [], []>} : vector<6x128xbf16>, vector<128x96xbf16>, vector<6x96xf32> -> vector<6x96xf32>
    %43 = arith.addf %31, %42 : vector<6x96xf32>
    %c6_55 = arith.constant 6 : index
    %c0_56 = arith.constant 0 : index
    %44 = vector.load %arg18[%c6_55, %c0_56] : memref<16x128xf32, #tpu.memory_space<vmem>>, vector<2x128xf32>
    %c0_57 = arith.constant 0 : index
    %c0_58 = arith.constant 0 : index
    %45 = vector.load %arg19[%c0_57, %c0_58] : memref<6x128xf32, #tpu.memory_space<vmem>>, vector<2x128xf32>
    tpu.vector_store %arg19[%c0_57, %c0_58], %44 {strides = array<i32>} : memref<6x128xf32, #tpu.memory_space<vmem>>, vector<2x128xf32>,
    %c10_59 = arith.constant 10 : index
    %c0_60 = arith.constant 0 : index
    %46 = vector.load %arg18[%c10_59, %c0_60] : memref<16x128xf32, #tpu.memory_space<vmem>>, vector<2x128xf32>
    %c2_61 = arith.constant 2 : index
    %c0_62 = arith.constant 0 : index
    %47 = vector.load %arg19[%c2_61, %c0_62] : memref<6x128xf32, #tpu.memory_space<vmem>>, vector<2x128xf32>
    tpu.vector_store %arg19[%c2_61, %c0_62], %46 {strides = array<i32>} : memref<6x128xf32, #tpu.memory_space<vmem>>, vector<2x128xf32>,
    %c14 = arith.constant 14 : index
    %c0_63 = arith.constant 0 : index
    %48 = vector.load %arg18[%c14, %c0_63] : memref<16x128xf32, #tpu.memory_space<vmem>>, vector<2x128xf32>
    %c4_64 = arith.constant 4 : index
    %c0_65 = arith.constant 0 : index
    %49 = vector.load %arg19[%c4_64, %c0_65] : memref<6x128xf32, #tpu.memory_space<vmem>>, vector<2x128xf32>
    tpu.vector_store %arg19[%c4_64, %c0_65], %48 {strides = array<i32>} : memref<6x128xf32, #tpu.memory_space<vmem>>, vector<2x128xf32>,
    %c0_66 = arith.constant 0 : index
    %c0_67 = arith.constant 0 : index
    %50 = vector.load %arg19[%c0_66, %c0_67] : memref<6x128xf32, #tpu.memory_space<vmem>>, vector<6x128xf32>
    %51 = arith.truncf %50 : vector<6x128xf32> to vector<6x128xbf16>
    %c3 = arith.constant 3 : index
    %c0_68 = arith.constant 0 : index
    %c0_69 = arith.constant 0 : index
    %52 = vector.load %arg3[%c3, %c0_68, %c0_69] : memref<4x128x96xbf16, #tpu.memory_space<vmem>>, vector<1x128x96xbf16>
    %53 = vector.shape_cast %52 : vector<1x128x96xbf16> to vector<128x96xbf16>
    %cst_70 = arith.constant dense<0.000000e+00> : vector<6x96xf32>
    %54 = tpu.matmul %51, %53, %cst_70 {dimension_numbers = #tpu.dot_dimension_numbers<[1], [0], [0], [1], [0, 0, 1, 1], [], []>} : vector<6x128xbf16>, vector<128x96xbf16>, vector<6x96xf32> -> vector<6x96xf32>
    %55 = arith.addf %43, %54 : vector<6x96xf32>
    %c0_71 = arith.constant 0 : index
    %c0_72 = arith.constant 0 : index
    %56 = vector.load %arg4[%c0_71, %c0_72] : memref<1x96xf32, #tpu.memory_space<vmem>>, vector<1x96xf32>
    %57 = vector.broadcast %56 : vector<1x96xf32> to vector<6x96xf32>
    %58 = arith.addf %55, %57 : vector<6x96xf32>
    %cst_73 = arith.constant 0.000000e+00 : f32
    %59 = vector.broadcast %cst_73 : f32 to vector<6x96xf32>
    %60 = arith.maximumf %58, %59 : vector<6x96xf32>
    %c0_74 = arith.constant 0 : index
    %c0_75 = arith.constant 0 : index
    %61 = vector.load %arg20[%c0_74, %c0_75] : memref<6x96xf32, #tpu.memory_space<vmem>>, vector<6x96xf32>
    tpu.vector_store %arg20[%c0_74, %c0_75], %60 {strides = array<i32>} : memref<6x96xf32, #tpu.memory_space<vmem>>, vector<6x96xf32>,
    %c0_76 = arith.constant 0 : index
    %c0_77 = arith.constant 0 : index
    %62 = vector.load %arg20[%c0_76, %c0_77] : memref<6x96xf32, #tpu.memory_space<vmem>>, vector<2x96xf32>
    %63 = arith.truncf %62 : vector<2x96xf32> to vector<2x96xbf16>
    %c0_78 = arith.constant 0 : index
    %c0_79 = arith.constant 0 : index
    %c0_80 = arith.constant 0 : index
    %64 = vector.load %arg5[%c0_78, %c0_79, %c0_80] : memref<3x96x32xbf16, #tpu.memory_space<vmem>>, vector<1x96x32xbf16>
    %65 = vector.shape_cast %64 : vector<1x96x32xbf16> to vector<96x32xbf16>
    %cst_81 = arith.constant dense<0.000000e+00> : vector<2x32xf32>
    %66 = tpu.matmul %63, %65, %cst_81 {dimension_numbers = #tpu.dot_dimension_numbers<[1], [0], [0], [1], [0, 0, 1, 1], [], []>} : vector<2x96xbf16>, vector<96x32xbf16>, vector<2x32xf32> -> vector<2x32xf32>
    %c2_82 = arith.constant 2 : index
    %c0_83 = arith.constant 0 : index
    %67 = vector.load %arg20[%c2_82, %c0_83] : memref<6x96xf32, #tpu.memory_space<vmem>>, vector<2x96xf32>
    %68 = arith.truncf %67 : vector<2x96xf32> to vector<2x96xbf16>
    %c1_84 = arith.constant 1 : index
    %c0_85 = arith.constant 0 : index
    %c0_86 = arith.constant 0 : index
    %69 = vector.load %arg5[%c1_84, %c0_85, %c0_86] : memref<3x96x32xbf16, #tpu.memory_space<vmem>>, vector<1x96x32xbf16>
    %70 = vector.shape_cast %69 : vector<1x96x32xbf16> to vector<96x32xbf16>
    %cst_87 = arith.constant dense<0.000000e+00> : vector<2x32xf32>
    %71 = tpu.matmul %68, %70, %cst_87 {dimension_numbers = #tpu.dot_dimension_numbers<[1], [0], [0], [1], [0, 0, 1, 1], [], []>} : vector<2x96xbf16>, vector<96x32xbf16>, vector<2x32xf32> -> vector<2x32xf32>
    %72 = arith.addf %66, %71 : vector<2x32xf32>
    %c4_88 = arith.constant 4 : index
    %c0_89 = arith.constant 0 : index
    %73 = vector.load %arg20[%c4_88, %c0_89] : memref<6x96xf32, #tpu.memory_space<vmem>>, vector<2x96xf32>
    %74 = arith.truncf %73 : vector<2x96xf32> to vector<2x96xbf16>
    %c2_90 = arith.constant 2 : index
    %c0_91 = arith.constant 0 : index
    %c0_92 = arith.constant 0 : index
    %75 = vector.load %arg5[%c2_90, %c0_91, %c0_92] : memref<3x96x32xbf16, #tpu.memory_space<vmem>>, vector<1x96x32xbf16>
    %76 = vector.shape_cast %75 : vector<1x96x32xbf16> to vector<96x32xbf16>
    %cst_93 = arith.constant dense<0.000000e+00> : vector<2x32xf32>
    %77 = tpu.matmul %74, %76, %cst_93 {dimension_numbers = #tpu.dot_dimension_numbers<[1], [0], [0], [1], [0, 0, 1, 1], [], []>} : vector<2x96xbf16>, vector<96x32xbf16>, vector<2x32xf32> -> vector<2x32xf32>
    %78 = arith.addf %72, %77 : vector<2x32xf32>
    %c0_94 = arith.constant 0 : index
    %c0_95 = arith.constant 0 : index
    %79 = vector.load %arg6[%c0_94, %c0_95] : memref<1x32xf32, #tpu.memory_space<vmem>>, vector<1x32xf32>
    %80 = vector.broadcast %79 : vector<1x32xf32> to vector<2x32xf32>
    %81 = arith.addf %78, %80 : vector<2x32xf32>
    %cst_96 = arith.constant 0.000000e+00 : f32
    %82 = vector.broadcast %cst_96 : f32 to vector<2x32xf32>
    %83 = arith.maximumf %81, %82 : vector<2x32xf32>
    %84 = arith.truncf %83 : vector<2x32xf32> to vector<2x32xbf16>
    %c0_97 = arith.constant 0 : index
    %c0_98 = arith.constant 0 : index
    %85 = vector.load %arg7[%c0_97, %c0_98] : memref<32x128xbf16, #tpu.memory_space<vmem>>, vector<32x128xbf16>
    %cst_99 = arith.constant dense<0.000000e+00> : vector<2x128xf32>
    %86 = tpu.matmul %84, %85, %cst_99 {dimension_numbers = #tpu.dot_dimension_numbers<[1], [0], [0], [1], [0, 0, 1, 1], [], []>} : vector<2x32xbf16>, vector<32x128xbf16>, vector<2x128xf32> -> vector<2x128xf32>
    %c0_100 = arith.constant 0 : index
    %c0_101 = arith.constant 0 : index
    %87 = vector.load %arg8[%c0_100, %c0_101] : memref<1x128xf32, #tpu.memory_space<vmem>>, vector<1x128xf32>
    %88 = vector.broadcast %87 : vector<1x128xf32> to vector<2x128xf32>
    %89 = arith.addf %86, %88 : vector<2x128xf32>
    %cst_102 = arith.constant dense<0.000000e+00> : vector<2xf32>
    %90 = vector.multi_reduction <add>, %89, %cst_102 [1] : vector<2x128xf32> to vector<2xf32>
    %91 = vector.shape_cast %90 : vector<2xf32> to vector<2x1xf32>
    %cst_103 = arith.constant 1.280000e+02 : f32
    %92 = vector.broadcast %cst_103 : f32 to vector<2x1xf32>
    %93 = arith.divf %91, %92 : vector<2x1xf32>
    %94 = vector.broadcast %93 : vector<2x1xf32> to vector<2x128xf32>
    %95 = arith.subf %89, %94 : vector<2x128xf32>
    %96 = arith.mulf %95, %95 : vector<2x128xf32>
    %cst_104 = arith.constant dense<0.000000e+00> : vector<2xf32>
    %97 = vector.multi_reduction <add>, %96, %cst_104 [1] : vector<2x128xf32> to vector<2xf32>
    %98 = vector.shape_cast %97 : vector<2xf32> to vector<2x1xf32>
    %cst_105 = arith.constant 1.280000e+02 : f32
    %99 = vector.broadcast %cst_105 : f32 to vector<2x1xf32>
    %100 = arith.divf %98, %99 : vector<2x1xf32>
    %cst_106 = arith.constant 9.99999974E-6 : f32
    %101 = vector.broadcast %cst_106 : f32 to vector<2x1xf32>
    %102 = arith.addf %100, %101 : vector<2x1xf32>
    %103 = math.rsqrt %102 : vector<2x1xf32>
    %104 = vector.broadcast %103 : vector<2x1xf32> to vector<2x128xf32>
    %105 = arith.mulf %95, %104 : vector<2x128xf32>
    %c0_107 = arith.constant 0 : index
    %c0_108 = arith.constant 0 : index
    %106 = vector.load %arg9[%c0_107, %c0_108] : memref<1x128xf32, #tpu.memory_space<vmem>>, vector<1x128xf32>
    %107 = vector.broadcast %106 : vector<1x128xf32> to vector<2x128xf32>
    %108 = arith.mulf %105, %107 : vector<2x128xf32>
    %c0_109 = arith.constant 0 : index
    %c0_110 = arith.constant 0 : index
    %109 = vector.load %arg10[%c0_109, %c0_110] : memref<1x128xf32, #tpu.memory_space<vmem>>, vector<1x128xf32>
    %110 = vector.broadcast %109 : vector<1x128xf32> to vector<2x128xf32>
    %111 = arith.addf %108, %110 : vector<2x128xf32>
    %cst_111 = arith.constant 0.000000e+00 : f32
    %112 = vector.broadcast %cst_111 : f32 to vector<2x128xf32>
    %113 = arith.maximumf %111, %112 : vector<2x128xf32>
    %114 = arith.truncf %113 : vector<2x128xf32> to vector<2x128xbf16>
    %c0_112 = arith.constant 0 : index
    %c0_113 = arith.constant 0 : index
    %115 = vector.load %arg11[%c0_112, %c0_113] : memref<128x128xbf16, #tpu.memory_space<vmem>>, vector<128x128xbf16>
    %cst_114 = arith.constant dense<0.000000e+00> : vector<2x128xf32>
    %116 = tpu.matmul %114, %115, %cst_114 {dimension_numbers = #tpu.dot_dimension_numbers<[1], [0], [0], [1], [0, 0, 1, 1], [], []>} : vector<2x128xbf16>, vector<128x128xbf16>, vector<2x128xf32> -> vector<2x128xf32>
    %c0_115 = arith.constant 0 : index
    %c0_116 = arith.constant 0 : index
    %117 = vector.load %arg12[%c0_115, %c0_116] : memref<1x128xf32, #tpu.memory_space<vmem>>, vector<1x128xf32>
    %118 = vector.broadcast %117 : vector<1x128xf32> to vector<2x128xf32>
    %119 = arith.addf %116, %118 : vector<2x128xf32>
    %cst_117 = arith.constant dense<0.000000e+00> : vector<2xf32>
    %120 = vector.multi_reduction <add>, %119, %cst_117 [1] : vector<2x128xf32> to vector<2xf32>
    %121 = vector.shape_cast %120 : vector<2xf32> to vector<2x1xf32>
    %cst_118 = arith.constant 1.280000e+02 : f32
    %122 = vector.broadcast %cst_118 : f32 to vector<2x1xf32>
    %123 = arith.divf %121, %122 : vector<2x1xf32>
    %124 = vector.broadcast %123 : vector<2x1xf32> to vector<2x128xf32>
    %125 = arith.subf %119, %124 : vector<2x128xf32>
    %126 = arith.mulf %125, %125 : vector<2x128xf32>
    %cst_119 = arith.constant dense<0.000000e+00> : vector<2xf32>
    %127 = vector.multi_reduction <add>, %126, %cst_119 [1] : vector<2x128xf32> to vector<2xf32>
    %128 = vector.shape_cast %127 : vector<2xf32> to vector<2x1xf32>
    %cst_120 = arith.constant 1.280000e+02 : f32
    %129 = vector.broadcast %cst_120 : f32 to vector<2x1xf32>
    %130 = arith.divf %128, %129 : vector<2x1xf32>
    %cst_121 = arith.constant 9.99999974E-6 : f32
    %131 = vector.broadcast %cst_121 : f32 to vector<2x1xf32>
    %132 = arith.addf %130, %131 : vector<2x1xf32>
    %133 = math.rsqrt %132 : vector<2x1xf32>
    %134 = vector.broadcast %133 : vector<2x1xf32> to vector<2x128xf32>
    %135 = arith.mulf %125, %134 : vector<2x128xf32>
    %c0_122 = arith.constant 0 : index
    %c0_123 = arith.constant 0 : index
    %136 = vector.load %arg13[%c0_122, %c0_123] : memref<1x128xf32, #tpu.memory_space<vmem>>, vector<1x128xf32>
    %137 = vector.broadcast %136 : vector<1x128xf32> to vector<2x128xf32>
    %138 = arith.mulf %135, %137 : vector<2x128xf32>
    %c0_124 = arith.constant 0 : index
    %c0_125 = arith.constant 0 : index
    %139 = vector.load %arg14[%c0_124, %c0_125] : memref<1x128xf32, #tpu.memory_space<vmem>>, vector<1x128xf32>
    %140 = vector.broadcast %139 : vector<1x128xf32> to vector<2x128xf32>
    %141 = arith.addf %138, %140 : vector<2x128xf32>
    %cst_126 = arith.constant 0.000000e+00 : f32
    %142 = vector.broadcast %cst_126 : f32 to vector<2x128xf32>
    %143 = arith.maximumf %141, %142 : vector<2x128xf32>
    %144 = arith.truncf %143 : vector<2x128xf32> to vector<2x128xbf16>
    %c0_127 = arith.constant 0 : index
    %c0_128 = arith.constant 0 : index
    %145 = vector.load %arg15[%c0_127, %c0_128] : memref<128x4xbf16, #tpu.memory_space<vmem>>, vector<128x4xbf16>
    %cst_129 = arith.constant dense<0.000000e+00> : vector<2x4xf32>
    %146 = tpu.matmul %144, %145, %cst_129 {dimension_numbers = #tpu.dot_dimension_numbers<[1], [0], [0], [1], [0, 0, 1, 1], [], []>} : vector<2x128xbf16>, vector<128x4xbf16>, vector<2x4xf32> -> vector<2x4xf32>
    %c0_130 = arith.constant 0 : index
    %c0_131 = arith.constant 0 : index
    %147 = vector.load %arg16[%c0_130, %c0_131] : memref<1x4xf32, #tpu.memory_space<vmem>>, vector<1x4xf32>
    %148 = vector.broadcast %147 : vector<1x4xf32> to vector<2x4xf32>
    %149 = arith.addf %146, %148 : vector<2x4xf32>
    %150 = math.tanh %149 : vector<2x4xf32>
    %c0_132 = arith.constant 0 : index
    %c0_133 = arith.constant 0 : index
    %151 = vector.load %arg17[%c0_132, %c0_133] : memref<2x4xf32, #tpu.memory_space<vmem>>, vector<2x4xf32>
    tpu.vector_store %arg17[%c0_132, %c0_133], %150 {strides = array<i32>} : memref<2x4xf32, #tpu.memory_space<vmem>>, vector<2x4xf32>,
    return
  }
}

</mosaic_0001>

<llo_original>
// kernel: forward.1
$region0: #{forward.1}
  #allocation0 [shape = 'u32[]', space=smem, size = 0x4, offset = 0x4, fixed_abs, tag = 'smem constant byte address 0x4 - core index']
  #allocation1 [shape = 'u32[72,128]{1,0:T(1,128)}', space=vmem, size = 0x9000, scoped, tag = 'internal scratch']
  #allocation2 [shape = 'f32[16,128]{1,0:T(8,128)}', space=vmem, size = 0x2000, scoped, tag = 'scratch operand']
  #allocation3 [shape = 'f32[6,128]{1,0:T(8,128)}', space=vmem, size = 0x1000, scoped, tag = 'scratch operand']
  #allocation4 [shape = 'f32[6,96]{1,0:T(8,128)}', space=vmem, size = 0x1000, scoped, tag = 'scratch operand']
  #allocation5 [shape = 'f32[2,96]{1,0:T(2,128)}', space=vmem, size = 0x400, scoped, tag = 'scratch operand']
  %s0 = inlined_call_operand.vmem [shape: bf16[16,1152], index: 0, kind: input, shape index: {}]
  %s1 = inlined_call_operand.vmem [shape: bf16[1152,128], index: 1, kind: input, shape index: {}]
  %s2 = inlined_call_operand.vmem [shape: f32[1,128], index: 2, kind: input, shape index: {}]
  %s3 = inlined_call_operand.vmem [shape: bf16[4,128,96], index: 3, kind: input, shape index: {}]
  %s4 = inlined_call_operand.vmem [shape: f32[1,96], index: 4, kind: input, shape index: {}]
  %s5 = inlined_call_operand.vmem [shape: bf16[3,96,32], index: 5, kind: input, shape index: {}]
  %s6 = inlined_call_operand.vmem [shape: f32[1,32], index: 6, kind: input, shape index: {}]
  %s7 = inlined_call_operand.vmem [shape: bf16[32,128], index: 7, kind: input, shape index: {}]
  %s8 = inlined_call_operand.vmem [shape: f32[1,128], index: 8, kind: input, shape index: {}]
  %s9 = inlined_call_operand.vmem [shape: f32[1,128], index: 9, kind: input, shape index: {}]
  %s10 = inlined_call_operand.vmem [shape: f32[1,128], index: 10, kind: input, shape index: {}]
  %s11 = inlined_call_operand.vmem [shape: bf16[128,128], index: 11, kind: input, shape index: {}]
  %s12 = inlined_call_operand.vmem [shape: f32[1,128], index: 12, kind: input, shape index: {}]
  %s13 = inlined_call_operand.vmem [shape: f32[1,128], index: 13, kind: input, shape index: {}]
  %s14 = inlined_call_operand.vmem [shape: f32[1,128], index: 14, kind: input, shape index: {}]
  %s15 = inlined_call_operand.vmem [shape: bf16[128,4], index: 15, kind: input, shape index: {}]
  %s16 = inlined_call_operand.vmem [shape: f32[1,4], index: 16, kind: input, shape index: {}]
  %s17 = inlined_call_operand.hbm [shape: f32[2,4], index: 17, kind: output, shape index: {}]
  %s18 = sld [smem:[#allocation0]]
  $region78: #{forward.1} parent=0
    _
  %s20 = ssub.s32 1, %s18
  %s21 = scalar_select 0, %s20, %s18
  $region1: #{forward.1} parent=0
    #allocation6 [shape = 'u8[1024]{0}', space=vmem, size = 0x400, scoped, tag = 'output window, operand 0, single buffered']
    #allocation7 [shape = 's32[1]{0}', space=sflag, size = 0x4, scoped, tag = 'scoped memory for forward.1']
    %22 = vsyncpa [#allocation7], 0
    // Predicated region
    $region2: #{forward.1} parent=1 // pred_check
      _
    $region3: #{forward.1} parent=1 // pred_check_branch
      %24 = sbr.rel (0) target = $region5
    $region4: #{forward.1} parent=1 // pred_region
      _
    $region5: #{forward.1} parent=1 // pred_fallthru
      _
    // Predicated region
    $region6: #{forward.1} parent=1 // pred_check
      _
    $region7: #{forward.1} parent=1 // pred_check_branch
      %26 = sbr.rel (0) target = $region9
    $region8: #{forward.1} parent=1 // pred_region
      _
    $region9: #{forward.1} parent=1 // pred_fallthru
      _
    // Predicated region
    $region10: #{forward.1} parent=1 // pred_check
      _
    $region11: #{forward.1} parent=1 // pred_check_branch
      %28 = sbr.rel (0) target = $region13
    $region12: #{forward.1} parent=1 // pred_region
      _
    $region13: #{forward.1} parent=1 // pred_fallthru
      _
    // Predicated region
    $region14: #{forward.1} parent=1 // pred_check
      _
    $region15: #{forward.1} parent=1 // pred_check_branch
      %30 = sbr.rel (0) target = $region17
    $region16: #{forward.1} parent=1 // pred_region
      _
    $region17: #{forward.1} parent=1 // pred_fallthru
      _
    // Predicated region
    $region18: #{forward.1} parent=1 // pred_check
      _
    $region19: #{forward.1} parent=1 // pred_check_branch
      %32 = sbr.rel (0) target = $region21
    $region20: #{forward.1} parent=1 // pred_region
      _
    $region21: #{forward.1} parent=1 // pred_fallthru
      _
    // Predicated region
    $region22: #{forward.1} parent=1 // pred_check
      _
    $region23: #{forward.1} parent=1 // pred_check_branch
      %34 = sbr.rel (0) target = $region25
    $region24: #{forward.1} parent=1 // pred_region
      _
    $region25: #{forward.1} parent=1 // pred_fallthru
      _
    // Predicated region
    $region26: #{forward.1} parent=1 // pred_check
      _
    $region27: #{forward.1} parent=1 // pred_check_branch
      %36 = sbr.rel (0) target = $region29
    $region28: #{forward.1} parent=1 // pred_region
      _
    $region29: #{forward.1} parent=1 // pred_fallthru
      _
    // Predicated region
    $region30: #{forward.1} parent=1 // pred_check
      _
    $region31: #{forward.1} parent=1 // pred_check_branch
      %38 = sbr.rel (0) target = $region33
    $region32: #{forward.1} parent=1 // pred_region
      _
    $region33: #{forward.1} parent=1 // pred_fallthru
      _
    // Predicated region
    $region34: #{forward.1} parent=1 // pred_check
      _
    $region35: #{forward.1} parent=1 // pred_check_branch
      %40 = sbr.rel (0) target = $region37
    $region36: #{forward.1} parent=1 // pred_region
      _
    $region37: #{forward.1} parent=1 // pred_fallthru
      _
    // Predicated region
    $region38: #{forward.1} parent=1 // pred_check
      _
    $region39: #{forward.1} parent=1 // pred_check_branch
      %42 = sbr.rel (0) target = $region41
    $region40: #{forward.1} parent=1 // pred_region
      _
    $region41: #{forward.1} parent=1 // pred_fallthru
      _
    // Predicated region
    $region42: #{forward.1} parent=1 // pred_check
      _
    $region43: #{forward.1} parent=1 // pred_check_branch
      %44 = sbr.rel (0) target = $region45
    $region44: #{forward.1} parent=1 // pred_region
      _
    $region45: #{forward.1} parent=1 // pred_fallthru
      _
    // Predicated region
    $region46: #{forward.1} parent=1 // pred_check
      _
    $region47: #{forward.1} parent=1 // pred_check_branch
      %46 = sbr.rel (0) target = $region49
    $region48: #{forward.1} parent=1 // pred_region
      _
    $region49: #{forward.1} parent=1 // pred_fallthru
      _
    // Predicated region
    $region50: #{forward.1} parent=1 // pred_check
      _
    $region51: #{forward.1} parent=1 // pred_check_branch
      %48 = sbr.rel (0) target = $region53
    $region52: #{forward.1} parent=1 // pred_region
      _
    $region53: #{forward.1} parent=1 // pred_fallthru
      _
    // Predicated region
    $region54: #{forward.1} parent=1 // pred_check
      _
    $region55: #{forward.1} parent=1 // pred_check_branch
      %50 = sbr.rel (0) target = $region57
    $region56: #{forward.1} parent=1 // pred_region
      _
    $region57: #{forward.1} parent=1 // pred_fallthru
      _
    // Predicated region
    $region58: #{forward.1} parent=1 // pred_check
      _
    $region59: #{forward.1} parent=1 // pred_check_branch
      %52 = sbr.rel (0) target = $region61
    $region60: #{forward.1} parent=1 // pred_region
      _
    $region61: #{forward.1} parent=1 // pred_fallthru
      _
    // Predicated region
    $region62: #{forward.1} parent=1 // pred_check
      _
    $region63: #{forward.1} parent=1 // pred_check_branch
      %54 = sbr.rel (0) target = $region65
    $region64: #{forward.1} parent=1 // pred_region
      _
    $region65: #{forward.1} parent=1 // pred_fallthru
      _
    // Predicated region
    $region66: #{forward.1} parent=1 // pred_check
      _
    $region67: #{forward.1} parent=1 // pred_check_branch
      %56 = sbr.rel (0) target = $region69
    $region68: #{forward.1} parent=1 // pred_region
      _
    $region69: #{forward.1} parent=1 // pred_fallthru
      _
    %v58 = vld [vmem:[%s0] sm:$0xff]
    %v59 = vld [vmem:[%s0 + $0x8] sm:$0xff]
    %v60 = vld [vmem:[%s0 + $0x10] sm:$0xff]
    %v61 = vld [vmem:[%s0 + $0x18] sm:$0xff]
    %v62 = vld [vmem:[%s0 + $0x20] sm:$0xf]
    %v63 = vld [vmem:[%s0 + $0x24] sm:$0xff]
    %v64 = vld [vmem:[%s0 + $0x2c] sm:$0xff]
    %v65 = vld [vmem:[%s0 + $0x34] sm:$0xff]
    %v66 = vld [vmem:[%s0 + $0x3c] sm:$0xff]
    %v67 = vld [vmem:[%s0 + $0x44] sm:$0xf]
    %v68 = vld [vmem:[%s1] sm:$0xf]
    %v69 = vld [vmem:[%s1 + $0x4] sm:$0xf]
    %v70 = vld [vmem:[%s1 + $0x8] sm:$0xf]
    %v71 = vld [vmem:[%s1 + $0xc] sm:$0xf]
    %v72 = vld [vmem:[%s1 + $0x10] sm:$0xf]
    %v73 = vld [vmem:[%s1 + $0x14] sm:$0xf]
    %v74 = vld [vmem:[%s1 + $0x18] sm:$0xf]
    %v75 = vld [vmem:[%s1 + $0x1c] sm:$0xf]
    %v76 = vld [vmem:[%s1 + $0x20] sm:$0xf]
    %v77 = vld [vmem:[%s1 + $0x24] sm:$0xf]
    %v78 = vld [vmem:[%s1 + $0x28] sm:$0xf]
    %v79 = vld [vmem:[%s1 + $0x2c] sm:$0xf]
    %v80 = vld [vmem:[%s1 + $0x30] sm:$0xf]
    %v81 = vld [vmem:[%s1 + $0x34] sm:$0xf]
    %v82 = vld [vmem:[%s1 + $0x38] sm:$0xf]
    %v83 = vld [vmem:[%s1 + $0x3c] sm:$0xf]
    %v84 = vld [vmem:[%s1 + $0x40] sm:$0xf]
    %v85 = vld [vmem:[%s1 + $0x44] sm:$0xf]
    %v86 = vld [vmem:[%s1 + $0x48] sm:$0xf]
    %v87 = vld [vmem:[%s1 + $0x4c] sm:$0xf]
    %v88 = vld [vmem:[%s1 + $0x50] sm:$0xf]
    %v89 = vld [vmem:[%s1 + $0x54] sm:$0xf]
    %v90 = vld [vmem:[%s1 + $0x58] sm:$0xf]
    %v91 = vld [vmem:[%s1 + $0x5c] sm:$0xf]
    %v92 = vld [vmem:[%s1 + $0x60] sm:$0xf]
    %v93 = vld [vmem:[%s1 + $0x64] sm:$0xf]
    %v94 = vld [vmem:[%s1 + $0x68] sm:$0xf]
    %v95 = vld [vmem:[%s1 + $0x6c] sm:$0xf]
    %v96 = vld [vmem:[%s1 + $0x70] sm:$0xf]
    %v97 = vld [vmem:[%s1 + $0x74] sm:$0xf]
    %v98 = vld [vmem:[%s1 + $0x78] sm:$0xf]
    %v99 = vld [vmem:[%s1 + $0x7c] sm:$0xf]
    %v100 = vld [vmem:[%s1 + $0x80] sm:$0xf]
    %v101 = vld [vmem:[%s1 + $0x84] sm:$0xf]
    %v102 = vld [vmem:[%s1 + $0x88] sm:$0xf]
    %v103 = vld [vmem:[%s1 + $0x8c] sm:$0xf]
    %v104 = vld [vmem:[%s1 + $0x90] sm:$0xf]
    %v105 = vld [vmem:[%s1 + $0x94] sm:$0xf]
    %v106 = vld [vmem:[%s1 + $0x98] sm:$0xf]
    %v107 = vld [vmem:[%s1 + $0x9c] sm:$0xf]
    %v108 = vld [vmem:[%s1 + $0xa0] sm:$0xf]
    %v109 = vld [vmem:[%s1 + $0xa4] sm:$0xf]
    %v110 = vld [vmem:[%s1 + $0xa8] sm:$0xf]
    %v111 = vld [vmem:[%s1 + $0xac] sm:$0xf]
    %v112 = vld [vmem:[%s1 + $0xb0] sm:$0xf]
    %v113 = vld [vmem:[%s1 + $0xb4] sm:$0xf]
    %v114 = vld [vmem:[%s1 + $0xb8] sm:$0xf]
    %v115 = vld [vmem:[%s1 + $0xbc] sm:$0xf]
    %v116 = vld [vmem:[%s1 + $0xc0] sm:$0xf]
    %v117 = vld [vmem:[%s1 + $0xc4] sm:$0xf]
    %v118 = vld [vmem:[%s1 + $0xc8] sm:$0xf]
    %v119 = vld [vmem:[%s1 + $0xcc] sm:$0xf]
    %v120 = vld [vmem:[%s1 + $0xd0] sm:$0xf]
    %v121 = vld [vmem:[%s1 + $0xd4] sm:$0xf]
    %v122 = vld [vmem:[%s1 + $0xd8] sm:$0xf]
    %v123 = vld [vmem:[%s1 + $0xdc] sm:$0xf]
    %v124 = vld [vmem:[%s1 + $0xe0] sm:$0xf]
    %v125 = vld [vmem:[%s1 + $0xe4] sm:$0xf]
    %v126 = vld [vmem:[%s1 + $0xe8] sm:$0xf]
    %v127 = vld [vmem:[%s1 + $0xec] sm:$0xf]
    %v128 = vld [vmem:[%s1 + $0xf0] sm:$0xf]
    %v129 = vld [vmem:[%s1 + $0xf4] sm:$0xf]
    %v130 = vld [vmem:[%s1 + $0xf8] sm:$0xf]
    %v131 = vld [vmem:[%s1 + $0xfc] sm:$0xf]
    %v132 = vld [vmem:[%s1 + $0x100] sm:$0xf]
    %v133 = vld [vmem:[%s1 + $0x104] sm:$0xf]
    %v134 = vld [vmem:[%s1 + $0x108] sm:$0xf]
    %v135 = vld [vmem:[%s1 + $0x10c] sm:$0xf]
    %v136 = vld [vmem:[%s1 + $0x110] sm:$0xf]
    %v137 = vld [vmem:[%s1 + $0x114] sm:$0xf]
    %v138 = vld [vmem:[%s1 + $0x118] sm:$0xf]
    %v139 = vld [vmem:[%s1 + $0x11c] sm:$0xf]
    %v140 = vld [vmem:[%s1 + $0x120] sm:$0xf]
    %v141 = vld [vmem:[%s1 + $0x124] sm:$0xf]
    %v142 = vld [vmem:[%s1 + $0x128] sm:$0xf]
    %v143 = vld [vmem:[%s1 + $0x12c] sm:$0xf]
    %v144 = vld [vmem:[%s1 + $0x130] sm:$0xf]
    %v145 = vld [vmem:[%s1 + $0x134] sm:$0xf]
    %v146 = vld [vmem:[%s1 + $0x138] sm:$0xf]
    %v147 = vld [vmem:[%s1 + $0x13c] sm:$0xf]
    %v148 = vld [vmem:[%s1 + $0x140] sm:$0xf]
    %v149 = vld [vmem:[%s1 + $0x144] sm:$0xf]
    %v150 = vld [vmem:[%s1 + $0x148] sm:$0xf]
    %v151 = vld [vmem:[%s1 + $0x14c] sm:$0xf]
    %v152 = vld [vmem:[%s1 + $0x150] sm:$0xf]
    %v153 = vld [vmem:[%s1 + $0x154] sm:$0xf]
    %v154 = vld [vmem:[%s1 + $0x158] sm:$0xf]
    %v155 = vld [vmem:[%s1 + $0x15c] sm:$0xf]
    %v156 = vld [vmem:[%s1 + $0x160] sm:$0xf]
    %v157 = vld [vmem:[%s1 + $0x164] sm:$0xf]
    %v158 = vld [vmem:[%s1 + $0x168] sm:$0xf]
    %v159 = vld [vmem:[%s1 + $0x16c] sm:$0xf]
    %v160 = vld [vmem:[%s1 + $0x170] sm:$0xf]
    %v161 = vld [vmem:[%s1 + $0x174] sm:$0xf]
    %v162 = vld [vmem:[%s1 + $0x178] sm:$0xf]
    %v163 = vld [vmem:[%s1 + $0x17c] sm:$0xf]
    %v164 = vld [vmem:[%s1 + $0x180] sm:$0xf]
    %v165 = vld [vmem:[%s1 + $0x184] sm:$0xf]
    %v166 = vld [vmem:[%s1 + $0x188] sm:$0xf]
    %v167 = vld [vmem:[%s1 + $0x18c] sm:$0xf]
    %v168 = vld [vmem:[%s1 + $0x190] sm:$0xf]
    %v169 = vld [vmem:[%s1 + $0x194] sm:$0xf]
    %v170 = vld [vmem:[%s1 + $0x198] sm:$0xf]
    %v171 = vld [vmem:[%s1 + $0x19c] sm:$0xf]
    %v172 = vld [vmem:[%s1 + $0x1a0] sm:$0xf]
    %v173 = vld [vmem:[%s1 + $0x1a4] sm:$0xf]
    %v174 = vld [vmem:[%s1 + $0x1a8] sm:$0xf]
    %v175 = vld [vmem:[%s1 + $0x1ac] sm:$0xf]
    %v176 = vld [vmem:[%s1 + $0x1b0] sm:$0xf]
    %v177 = vld [vmem:[%s1 + $0x1b4] sm:$0xf]
    %v178 = vld [vmem:[%s1 + $0x1b8] sm:$0xf]
    %v179 = vld [vmem:[%s1 + $0x1bc] sm:$0xf]
    %v180 = vld [vmem:[%s1 + $0x1c0] sm:$0xf]
    %v181 = vld [vmem:[%s1 + $0x1c4] sm:$0xf]
    %v182 = vld [vmem:[%s1 + $0x1c8] sm:$0xf]
    %v183 = vld [vmem:[%s1 + $0x1cc] sm:$0xf]
    %v184 = vld [vmem:[%s1 + $0x1d0] sm:$0xf]
    %v185 = vld [vmem:[%s1 + $0x1d4] sm:$0xf]
    %v186 = vld [vmem:[%s1 + $0x1d8] sm:$0xf]
    %v187 = vld [vmem:[%s1 + $0x1dc] sm:$0xf]
    %v188 = vld [vmem:[%s1 + $0x1e0] sm:$0xf]
    %v189 = vld [vmem:[%s1 + $0x1e4] sm:$0xf]
    %v190 = vld [vmem:[%s1 + $0x1e8] sm:$0xf]
    %v191 = vld [vmem:[%s1 + $0x1ec] sm:$0xf]
    %v192 = vld [vmem:[%s1 + $0x1f0] sm:$0xf]
    %v193 = vld [vmem:[%s1 + $0x1f4] sm:$0xf]
    %v194 = vld [vmem:[%s1 + $0x1f8] sm:$0xf]
    %v195 = vld [vmem:[%s1 + $0x1fc] sm:$0xf]
    %v196 = vld [vmem:[%s1 + $0x200] sm:$0xf]
    %v197 = vld [vmem:[%s1 + $0x204] sm:$0xf]
    %v198 = vld [vmem:[%s1 + $0x208] sm:$0xf]
    %v199 = vld [vmem:[%s1 + $0x20c] sm:$0xf]
    %v200 = vld [vmem:[%s1 + $0x210] sm:$0xf]
    %v201 = vld [vmem:[%s1 + $0x214] sm:$0xf]
    %v202 = vld [vmem:[%s1 + $0x218] sm:$0xf]
    %v203 = vld [vmem:[%s1 + $0x21c] sm:$0xf]
    %v204 = vld [vmem:[%s1 + $0x220] sm:$0xf]
    %v205 = vld [vmem:[%s1 + $0x224] sm:$0xf]
    %v206 = vld [vmem:[%s1 + $0x228] sm:$0xf]
    %v207 = vld [vmem:[%s1 + $0x22c] sm:$0xf]
    %v208 = vld [vmem:[%s1 + $0x230] sm:$0xf]
    %v209 = vld [vmem:[%s1 + $0x234] sm:$0xf]
    %v210 = vld [vmem:[%s1 + $0x238] sm:$0xf]
    %v211 = vld [vmem:[%s1 + $0x23c] sm:$0xf]
    %v212 = vld [vmem:[%s2] sm:$0x1]
    %v214 = vperm.slane %v212, 0
    %v226 = vunpack.c.l.b16 %v58
    %v227 = vunpack.c.h.b16 %v58
    %v228 = vunpack.c.l.b16 %v59
    %v229 = vunpack.c.h.b16 %v59
    %v230 = vunpack.c.l.b16 %v60
    %v231 = vunpack.c.h.b16 %v60
    %v232 = vunpack.c.l.b16 %v61
    %v233 = vunpack.c.h.b16 %v61
    %v234 = vunpack.c.l.b16 %v62
    %v235 = vunpack.c.l.b16 %v63
    %v236 = vunpack.c.h.b16 %v63
    %v237 = vunpack.c.l.b16 %v64
    %v238 = vunpack.c.h.b16 %v64
    %v239 = vunpack.c.l.b16 %v65
    %v240 = vunpack.c.h.b16 %v65
    %v241 = vunpack.c.l.b16 %v66
    %v242 = vunpack.c.h.b16 %v66
    %v243 = vunpack.c.l.b16 %v67
    %v244 = vpack.c.b16 %v235, %v226
    %v245 = vpack.c.b16 %v236, %v227
    %v246 = vpack.c.b16 %v237, %v228
    %v247 = vpack.c.b16 %v238, %v229
    %v248 = vpack.c.b16 %v239, %v230
    %v249 = vpack.c.b16 %v240, %v231
    %v250 = vpack.c.b16 %v241, %v232
    %v251 = vpack.c.b16 %v242, %v233
    %v252 = vpack.c.b16 %v243, %v234
    %v406 = vunpack.c.l.b16 %v68
    %v407 = vunpack.c.l.b16 %v69
    %v408 = vunpack.c.l.b16 %v70
    %v409 = vunpack.c.l.b16 %v71
    %v410 = vunpack.c.l.b16 %v72
    %v411 = vunpack.c.l.b16 %v73
    %v412 = vunpack.c.l.b16 %v74
    %v413 = vunpack.c.l.b16 %v75
    %v414 = vunpack.c.l.b16 %v76
    %v415 = vunpack.c.l.b16 %v77
    %v416 = vunpack.c.l.b16 %v78
    %v417 = vunpack.c.l.b16 %v79
    %v418 = vunpack.c.l.b16 %v80
    %v419 = vunpack.c.l.b16 %v81
    %v420 = vunpack.c.l.b16 %v82
    %v421 = vunpack.c.l.b16 %v83
    %v422 = vunpack.c.l.b16 %v84
    %v423 = vunpack.c.l.b16 %v85
    %v424 = vunpack.c.l.b16 %v86
    %v425 = vunpack.c.l.b16 %v87
    %v426 = vunpack.c.l.b16 %v88
    %v427 = vunpack.c.l.b16 %v89
    %v428 = vunpack.c.l.b16 %v90
    %v429 = vunpack.c.l.b16 %v91
    %v430 = vunpack.c.l.b16 %v92
    %v431 = vunpack.c.l.b16 %v93
    %v432 = vunpack.c.l.b16 %v94
    %v433 = vunpack.c.l.b16 %v95
    %v434 = vunpack.c.l.b16 %v96
    %v435 = vunpack.c.l.b16 %v97
    %v436 = vunpack.c.l.b16 %v98
    %v437 = vunpack.c.l.b16 %v99
    %v438 = vunpack.c.l.b16 %v100
    %v439 = vunpack.c.l.b16 %v101
    %v440 = vunpack.c.l.b16 %v102
    %v441 = vunpack.c.l.b16 %v103
    %v442 = vunpack.c.l.b16 %v104
    %v443 = vunpack.c.l.b16 %v105
    %v444 = vunpack.c.l.b16 %v106
    %v445 = vunpack.c.l.b16 %v107
    %v446 = vunpack.c.l.b16 %v108
    %v447 = vunpack.c.l.b16 %v109
    %v448 = vunpack.c.l.b16 %v110
    %v449 = vunpack.c.l.b16 %v111
    %v450 = vunpack.c.l.b16 %v112
    %v451 = vunpack.c.l.b16 %v113
    %v452 = vunpack.c.l.b16 %v114
    %v453 = vunpack.c.l.b16 %v115
    %v454 = vunpack.c.l.b16 %v116
    %v455 = vunpack.c.l.b16 %v117
    %v456 = vunpack.c.l.b16 %v118
    %v457 = vunpack.c.l.b16 %v119
    %v458 = vunpack.c.l.b16 %v120
    %v459 = vunpack.c.l.b16 %v121
    %v460 = vunpack.c.l.b16 %v122
    %v461 = vunpack.c.l.b16 %v123
    %v462 = vunpack.c.l.b16 %v124
    %v463 = vunpack.c.l.b16 %v125
    %v464 = vunpack.c.l.b16 %v126
    %v465 = vunpack.c.l.b16 %v127
    %v466 = vunpack.c.l.b16 %v128
    %v467 = vunpack.c.l.b16 %v129
    %v468 = vunpack.c.l.b16 %v130
    %v469 = vunpack.c.l.b16 %v131
    %v470 = vunpack.c.l.b16 %v132
    %v471 = vunpack.c.l.b16 %v133
    %v472 = vunpack.c.l.b16 %v134
    %v473 = vunpack.c.l.b16 %v135
    %v474 = vunpack.c.l.b16 %v136
    %v475 = vunpack.c.l.b16 %v137
    %v476 = vunpack.c.l.b16 %v138
    %v477 = vunpack.c.l.b16 %v139
    %v478 = vunpack.c.l.b16 %v140
    %v479 = vunpack.c.l.b16 %v141
    %v480 = vunpack.c.l.b16 %v142
    %v481 = vunpack.c.l.b16 %v143
    %v482 = vunpack.c.l.b16 %v144
    %v483 = vunpack.c.l.b16 %v145
    %v484 = vunpack.c.l.b16 %v146
    %v485 = vunpack.c.l.b16 %v147
    %v486 = vunpack.c.l.b16 %v148
    %v487 = vunpack.c.l.b16 %v149
    %v488 = vunpack.c.l.b16 %v150
    %v489 = vunpack.c.l.b16 %v151
    %v490 = vunpack.c.l.b16 %v152
    %v491 = vunpack.c.l.b16 %v153
    %v492 = vunpack.c.l.b16 %v154
    %v493 = vunpack.c.l.b16 %v155
    %v494 = vunpack.c.l.b16 %v156
    %v495 = vunpack.c.l.b16 %v157
    %v496 = vunpack.c.l.b16 %v158
    %v497 = vunpack.c.l.b16 %v159
    %v498 = vunpack.c.l.b16 %v160
    %v499 = vunpack.c.l.b16 %v161
    %v500 = vunpack.c.l.b16 %v162
    %v501 = vunpack.c.l.b16 %v163
    %v502 = vunpack.c.l.b16 %v164
    %v503 = vunpack.c.l.b16 %v165
    %v504 = vunpack.c.l.b16 %v166
    %v505 = vunpack.c.l.b16 %v167
    %v506 = vunpack.c.l.b16 %v168
    %v507 = vunpack.c.l.b16 %v169
    %v508 = vunpack.c.l.b16 %v170
    %v509 = vunpack.c.l.b16 %v171
    %v510 = vunpack.c.l.b16 %v172
    %v511 = vunpack.c.l.b16 %v173
    %v512 = vunpack.c.l.b16 %v174
    %v513 = vunpack.c.l.b16 %v175
    %v514 = vunpack.c.l.b16 %v176
    %v515 = vunpack.c.l.b16 %v177
    %v516 = vunpack.c.l.b16 %v178
    %v517 = vunpack.c.l.b16 %v179
    %v518 = vunpack.c.l.b16 %v180
    %v519 = vunpack.c.l.b16 %v181
    %v520 = vunpack.c.l.b16 %v182
    %v521 = vunpack.c.l.b16 %v183
    %v522 = vunpack.c.l.b16 %v184
    %v523 = vunpack.c.l.b16 %v185
    %v524 = vunpack.c.l.b16 %v186
    %v525 = vunpack.c.l.b16 %v187
    %v526 = vunpack.c.l.b16 %v188
    %v527 = vunpack.c.l.b16 %v189
    %v528 = vunpack.c.l.b16 %v190
    %v529 = vunpack.c.l.b16 %v191
    %v530 = vunpack.c.l.b16 %v192
    %v531 = vunpack.c.l.b16 %v193
    %v532 = vunpack.c.l.b16 %v194
    %v533 = vunpack.c.l.b16 %v195
    %v534 = vunpack.c.l.b16 %v196
    %v535 = vunpack.c.l.b16 %v197
    %v536 = vunpack.c.l.b16 %v198
    %v537 = vunpack.c.l.b16 %v199
    %v538 = vunpack.c.l.b16 %v200
    %v539 = vunpack.c.l.b16 %v201
    %v540 = vunpack.c.l.b16 %v202
    %v541 = vunpack.c.l.b16 %v203
    %v542 = vunpack.c.l.b16 %v204
    %v543 = vunpack.c.l.b16 %v205
    %v544 = vunpack.c.l.b16 %v206
    %v545 = vunpack.c.l.b16 %v207
    %v546 = vunpack.c.l.b16 %v208
    %v547 = vunpack.c.l.b16 %v209
    %v548 = vunpack.c.l.b16 %v210
    %v549 = vunpack.c.l.b16 %v211
    %v550 = vpack.c.b16 %v407, %v406
    %v551 = vpack.c.b16 %v409, %v408
    %v552 = vpack.c.b16 %v411, %v410
    %v553 = vpack.c.b16 %v413, %v412
    %v554 = vpack.c.b16 %v415, %v414
    %v555 = vpack.c.b16 %v417, %v416
    %v556 = vpack.c.b16 %v419, %v418
    %v557 = vpack.c.b16 %v421, %v420
    %v558 = vpack.c.b16 %v423, %v422
    %v559 = vpack.c.b16 %v425, %v424
    %v560 = vpack.c.b16 %v427, %v426
    %v561 = vpack.c.b16 %v429, %v428
    %v562 = vpack.c.b16 %v431, %v430
    %v563 = vpack.c.b16 %v433, %v432
    %v564 = vpack.c.b16 %v435, %v434
    %v565 = vpack.c.b16 %v437, %v436
    %v566 = vpack.c.b16 %v439, %v438
    %v567 = vpack.c.b16 %v441, %v440
    %v568 = vpack.c.b16 %v443, %v442
    %v569 = vpack.c.b16 %v445, %v444
    %v570 = vpack.c.b16 %v447, %v446
    %v571 = vpack.c.b16 %v449, %v448
    %v572 = vpack.c.b16 %v451, %v450
    %v573 = vpack.c.b16 %v453, %v452
    %v574 = vpack.c.b16 %v455, %v454
    %v575 = vpack.c.b16 %v457, %v456
    %v576 = vpack.c.b16 %v459, %v458
    %v577 = vpack.c.b16 %v461, %v460
    %v578 = vpack.c.b16 %v463, %v462
    %v579 = vpack.c.b16 %v465, %v464
    %v580 = vpack.c.b16 %v467, %v466
    %v581 = vpack.c.b16 %v469, %v468
    %v582 = vpack.c.b16 %v471, %v470
    %v583 = vpack.c.b16 %v473, %v472
    %v584 = vpack.c.b16 %v475, %v474
    %v585 = vpack.c.b16 %v477, %v476
    %v586 = vpack.c.b16 %v479, %v478
    %v587 = vpack.c.b16 %v481, %v480
    %v588 = vpack.c.b16 %v483, %v482
    %v589 = vpack.c.b16 %v485, %v484
    %v590 = vpack.c.b16 %v487, %v486
    %v591 = vpack.c.b16 %v489, %v488
    %v592 = vpack.c.b16 %v491, %v490
    %v593 = vpack.c.b16 %v493, %v492
    %v594 = vpack.c.b16 %v495, %v494
    %v595 = vpack.c.b16 %v497, %v496
    %v596 = vpack.c.b16 %v499, %v498
    %v597 = vpack.c.b16 %v501, %v500
    %v598 = vpack.c.b16 %v503, %v502
    %v599 = vpack.c.b16 %v505, %v504
    %v600 = vpack.c.b16 %v507, %v506
    %v601 = vpack.c.b16 %v509, %v508
    %v602 = vpack.c.b16 %v511, %v510
    %v603 = vpack.c.b16 %v513, %v512
    %v604 = vpack.c.b16 %v515, %v514
    %v605 = vpack.c.b16 %v517, %v516
    %v606 = vpack.c.b16 %v519, %v518
    %v607 = vpack.c.b16 %v521, %v520
    %v608 = vpack.c.b16 %v523, %v522
    %v609 = vpack.c.b16 %v525, %v524
    %v610 = vpack.c.b16 %v527, %v526
    %v611 = vpack.c.b16 %v529, %v528
    %v612 = vpack.c.b16 %v531, %v530
    %v613 = vpack.c.b16 %v533, %v532
    %v614 = vpack.c.b16 %v535, %v534
    %v615 = vpack.c.b16 %v537, %v536
    %v616 = vpack.c.b16 %v539, %v538
    %v617 = vpack.c.b16 %v541, %v540
    %v618 = vpack.c.b16 %v543, %v542
    %v619 = vpack.c.b16 %v545, %v544
    %v620 = vpack.c.b16 %v547, %v546
    %v621 = vpack.c.b16 %v549, %v548
    %694 = vmatpush.bf16.msra.mxu0 %v557
    %695 = vmatpush.bf16.msra.mxu0 %v556
    %696 = vmatpush.bf16.msra.mxu0 %v555
    %697 = vmatpush.bf16.msra.mxu0 %v554
    %698 = vmatpush.bf16.msra.mxu0 %v553
    %699 = vmatpush.bf16.msra.mxu0 %v552
    %700 = vmatpush.bf16.msra.mxu0 %v551
    %701 = vmatpush.bf16.msra.mxu0 %v550
    %702 = vmatmul.bf16.gmra.mxu0 %v244
    %v703 = vpop.f32.mrf.mxu0
    %v704 = vadd.f32 %v214, %v703
    %v705 = vpop.f32.mrf.mxu0
    %v706 = vadd.f32 %v214, %v705
    %707 = vdwg.mxu0
    %708 = vmatpush.bf16.msra.mxu0 %v565
    %709 = vmatpush.bf16.msra.mxu0 %v564
    %710 = vmatpush.bf16.msra.mxu0 %v563
    %711 = vmatpush.bf16.msra.mxu0 %v562
    %712 = vmatpush.bf16.msra.mxu0 %v561
    %713 = vmatpush.bf16.msra.mxu0 %v560
    %714 = vmatpush.bf16.msra.mxu0 %v559
    %715 = vmatpush.bf16.msra.mxu0 %v558
    %716 = vmatmul.bf16.gmra.mxu0 %v245
    %v717 = vpop.f32.mrf.mxu0
    %v718 = vadd.f32 %v704, %v717
    %v719 = vpop.f32.mrf.mxu0
    %v720 = vadd.f32 %v706, %v719
    %721 = vdwg.mxu0
    %722 = vmatpush.bf16.msra.mxu0 %v573
    %723 = vmatpush.bf16.msra.mxu0 %v572
    %724 = vmatpush.bf16.msra.mxu0 %v571
    %725 = vmatpush.bf16.msra.mxu0 %v570
    %726 = vmatpush.bf16.msra.mxu0 %v569
    %727 = vmatpush.bf16.msra.mxu0 %v568
    %728 = vmatpush.bf16.msra.mxu0 %v567
    %729 = vmatpush.bf16.msra.mxu0 %v566
    %730 = vmatmul.bf16.gmra.mxu0 %v246
    %v731 = vpop.f32.mrf.mxu0
    %v732 = vadd.f32 %v718, %v731
    %v733 = vpop.f32.mrf.mxu0
    %v734 = vadd.f32 %v720, %v733
    %735 = vdwg.mxu0
    %736 = vmatpush.bf16.msra.mxu0 %v581
    %737 = vmatpush.bf16.msra.mxu0 %v580
    %738 = vmatpush.bf16.msra.mxu0 %v579
    %739 = vmatpush.bf16.msra.mxu0 %v578
    %740 = vmatpush.bf16.msra.mxu0 %v577
    %741 = vmatpush.bf16.msra.mxu0 %v576
    %742 = vmatpush.bf16.msra.mxu0 %v575
    %743 = vmatpush.bf16.msra.mxu0 %v574
    %744 = vmatmul.bf16.gmra.mxu0 %v247
    %v745 = vpop.f32.mrf.mxu0
    %v746 = vadd.f32 %v732, %v745
    %v747 = vpop.f32.mrf.mxu0
    %v748 = vadd.f32 %v734, %v747
    %749 = vdwg.mxu0
    %750 = vmatpush.bf16.msra.mxu0 %v589
    %751 = vmatpush.bf16.msra.mxu0 %v588
    %752 = vmatpush.bf16.msra.mxu0 %v587
    %753 = vmatpush.bf16.msra.mxu0 %v586
    %754 = vmatpush.bf16.msra.mxu0 %v585
    %755 = vmatpush.bf16.msra.mxu0 %v584
    %756 = vmatpush.bf16.msra.mxu0 %v583
    %757 = vmatpush.bf16.msra.mxu0 %v582
    %758 = vmatmul.bf16.gmra.mxu0 %v248
    %v759 = vpop.f32.mrf.mxu0
    %v760 = vadd.f32 %v746, %v759
    %v761 = vpop.f32.mrf.mxu0
    %v762 = vadd.f32 %v748, %v761
    %763 = vdwg.mxu0
    %764 = vmatpush.bf16.msra.mxu0 %v597
    %765 = vmatpush.bf16.msra.mxu0 %v596
    %766 = vmatpush.bf16.msra.mxu0 %v595
    %767 = vmatpush.bf16.msra.mxu0 %v594
    %768 = vmatpush.bf16.msra.mxu0 %v593
    %769 = vmatpush.bf16.msra.mxu0 %v592
    %770 = vmatpush.bf16.msra.mxu0 %v591
    %771 = vmatpush.bf16.msra.mxu0 %v590
    %772 = vmatmul.bf16.gmra.mxu0 %v249
    %v773 = vpop.f32.mrf.mxu0
    %v774 = vadd.f32 %v760, %v773
    %v775 = vpop.f32.mrf.mxu0
    %v776 = vadd.f32 %v762, %v775
    %777 = vdwg.mxu0
    %778 = vmatpush.bf16.msra.mxu0 %v605
    %779 = vmatpush.bf16.msra.mxu0 %v604
    %780 = vmatpush.bf16.msra.mxu0 %v603
    %781 = vmatpush.bf16.msra.mxu0 %v602
    %782 = vmatpush.bf16.msra.mxu0 %v601
    %783 = vmatpush.bf16.msra.mxu0 %v600
    %784 = vmatpush.bf16.msra.mxu0 %v599
    %785 = vmatpush.bf16.msra.mxu0 %v598
    %786 = vmatmul.bf16.gmra.mxu0 %v250
    %v787 = vpop.f32.mrf.mxu0
    %v788 = vadd.f32 %v774, %v787
    %v789 = vpop.f32.mrf.mxu0
    %v790 = vadd.f32 %v776, %v789
    %791 = vdwg.mxu0
    %792 = vmatpush.bf16.msra.mxu0 %v613
    %793 = vmatpush.bf16.msra.mxu0 %v612
    %794 = vmatpush.bf16.msra.mxu0 %v611
    %795 = vmatpush.bf16.msra.mxu0 %v610
    %796 = vmatpush.bf16.msra.mxu0 %v609
    %797 = vmatpush.bf16.msra.mxu0 %v608
    %798 = vmatpush.bf16.msra.mxu0 %v607
    %799 = vmatpush.bf16.msra.mxu0 %v606
    %800 = vmatmul.bf16.gmra.mxu0 %v251
    %v801 = vpop.f32.mrf.mxu0
    %v802 = vadd.f32 %v788, %v801
    %v803 = vpop.f32.mrf.mxu0
    %v804 = vadd.f32 %v790, %v803
    %805 = vdwg.mxu0
    %806 = vmatpush.bf16.msra.mxu0 %v621
    %807 = vmatpush.bf16.msra.mxu0 %v620
    %808 = vmatpush.bf16.msra.mxu0 %v619
    %809 = vmatpush.bf16.msra.mxu0 %v618
    %810 = vmatpush.bf16.msra.mxu0 %v617
    %811 = vmatpush.bf16.msra.mxu0 %v616
    %812 = vmatpush.bf16.msra.mxu0 %v615
    %813 = vmatpush.bf16.msra.mxu0 %v614
    %814 = vmatmul.bf16.gmra.mxu0 %v252
    %v815 = vpop.f32.mrf.mxu0
    %v816 = vadd.f32 %v802, %v815
    %v817 = vpop.f32.mrf.mxu0
    %v818 = vadd.f32 %v804, %v817
    %819 = vdwg.mxu0
    %v820 = vmax.f32 %v816, 0.0
    %v821 = vmax.f32 %v818, 0.0
    %822 = vst [vmem:[#allocation2] sm:$0xff] %v820
    %823 = vst [vmem:[#allocation2 + $0x8] sm:$0xff] %v821
    %v824 = vld [vmem:[#allocation2] sm:$0x3]
    %825 = vst [vmem:[#allocation3] sm:$0x3] %v824
    %v826 = vld [vmem:[#allocation2 + $0x4] sm:$0x3]
    %827 = vst [vmem:[#allocation3 + $0x2] sm:$0x3] %v826
    %v828 = vld [vmem:[#allocation2 + $0x8] sm:$0x3]
    %829 = vst [vmem:[#allocation3 + $0x4] sm:$0x3] %v828
    %v830 = vld [vmem:[#allocation3] sm:$0x3f]
    %v831 = vpack.c.bf16 %v830, %v830
    %v832 = vld [vmem:[%s3] sm:$0xf]
    %v833 = vld [vmem:[%s3 + $0x4] sm:$0xf]
    %v834 = vld [vmem:[%s3 + $0x8] sm:$0xf]
    %v835 = vld [vmem:[%s3 + $0xc] sm:$0xf]
    %v836 = vld [vmem:[%s3 + $0x10] sm:$0xf]
    %v837 = vld [vmem:[%s3 + $0x14] sm:$0xf]
    %v838 = vld [vmem:[%s3 + $0x18] sm:$0xf]
    %v839 = vld [vmem:[%s3 + $0x1c] sm:$0xf]
    %v840 = vld [vmem:[%s3 + $0x20] sm:$0xf]
    %v841 = vld [vmem:[%s3 + $0x24] sm:$0xf]
    %v842 = vld [vmem:[%s3 + $0x28] sm:$0xf]
    %v843 = vld [vmem:[%s3 + $0x2c] sm:$0xf]
    %v844 = vld [vmem:[%s3 + $0x30] sm:$0xf]
    %v845 = vld [vmem:[%s3 + $0x34] sm:$0xf]
    %v846 = vld [vmem:[%s3 + $0x38] sm:$0xf]
    %v847 = vld [vmem:[%s3 + $0x3c] sm:$0xf]
    %v848 = vld [vmem:[#allocation2 + $0x2] sm:$0x3]
    %849 = vst [vmem:[#allocation3] sm:$0x3] %v848
    %v850 = vld [vmem:[#allocation2 + $0x6] sm:$0x3]
    %851 = vst [vmem:[#allocation3 + $0x2] sm:$0x3] %v850
    %v852 = vld [vmem:[#allocation2 + $0xa] sm:$0x3]
    %853 = vst [vmem:[#allocation3 + $0x4] sm:$0x3] %v852
    %v854 = vld [vmem:[#allocation3] sm:$0x3f]
    %v855 = vpack.c.bf16 %v854, %v854
    %s856 = scalar_lea.vmem %s3, 64
    %v857 = vld [vmem:[%s856] sm:$0xf]
    %v858 = vld [vmem:[%s856 + $0x4] sm:$0xf]
    %v859 = vld [vmem:[%s856 + $0x8] sm:$0xf]
    %v860 = vld [vmem:[%s856 + $0xc] sm:$0xf]
    %v861 = vld [vmem:[%s856 + $0x10] sm:$0xf]
    %v862 = vld [vmem:[%s856 + $0x14] sm:$0xf]
    %v863 = vld [vmem:[%s856 + $0x18] sm:$0xf]
    %v864 = vld [vmem:[%s856 + $0x1c] sm:$0xf]
    %v865 = vld [vmem:[%s856 + $0x20] sm:$0xf]
    %v866 = vld [vmem:[%s856 + $0x24] sm:$0xf]
    %v867 = vld [vmem:[%s856 + $0x28] sm:$0xf]
    %v868 = vld [vmem:[%s856 + $0x2c] sm:$0xf]
    %v869 = vld [vmem:[%s856 + $0x30] sm:$0xf]
    %v870 = vld [vmem:[%s856 + $0x34] sm:$0xf]
    %v871 = vld [vmem:[%s856 + $0x38] sm:$0xf]
    %v872 = vld [vmem:[%s856 + $0x3c] sm:$0xf]
    %v889 = vunpack.c.l.b16 %v857
    %v890 = vunpack.c.l.b16 %v858
    %v891 = vunpack.c.l.b16 %v859
    %v892 = vunpack.c.l.b16 %v860
    %v893 = vunpack.c.l.b16 %v861
    %v894 = vunpack.c.l.b16 %v862
    %v895 = vunpack.c.l.b16 %v863
    %v896 = vunpack.c.l.b16 %v864
    %v897 = vunpack.c.l.b16 %v865
    %v898 = vunpack.c.l.b16 %v866
    %v899 = vunpack.c.l.b16 %v867
    %v900 = vunpack.c.l.b16 %v868
    %v901 = vunpack.c.l.b16 %v869
    %v902 = vunpack.c.l.b16 %v870
    %v903 = vunpack.c.l.b16 %v871
    %v904 = vunpack.c.l.b16 %v872
    %v905 = vpack.c.b16 %v890, %v889
    %v906 = vpack.c.b16 %v892, %v891
    %v907 = vpack.c.b16 %v894, %v893
    %v908 = vpack.c.b16 %v896, %v895
    %v909 = vpack.c.b16 %v898, %v897
    %v910 = vpack.c.b16 %v900, %v899
    %v911 = vpack.c.b16 %v902, %v901
    %v912 = vpack.c.b16 %v904, %v903
    %921 = vmatpush.bf16.msra.mxu0 %v912
    %922 = vmatpush.bf16.msra.mxu0 %v911
    %923 = vmatpush.bf16.msra.mxu0 %v910
    %924 = vmatpush.bf16.msra.mxu0 %v909
    %925 = vmatpush.bf16.msra.mxu0 %v908
    %926 = vmatpush.bf16.msra.mxu0 %v907
    %927 = vmatpush.bf16.msra.mxu0 %v906
    %928 = vmatpush.bf16.msra.mxu0 %v905
    %929 = vmatmul.bf16.gmra.mxu0 %v855
    %v930 = vpop.f32.mrf.mxu0
    %v931 = vadd.f32 0.0, %v930
    %v932 = vpop.f32.mrf.mxu0
    %933 = vdwg.mxu0
    %v950 = vunpack.c.l.b16 %v832
    %v951 = vunpack.c.l.b16 %v833
    %v952 = vunpack.c.l.b16 %v834
    %v953 = vunpack.c.l.b16 %v835
    %v954 = vunpack.c.l.b16 %v836
    %v955 = vunpack.c.l.b16 %v837
    %v956 = vunpack.c.l.b16 %v838
    %v957 = vunpack.c.l.b16 %v839
    %v958 = vunpack.c.l.b16 %v840
    %v959 = vunpack.c.l.b16 %v841
    %v960 = vunpack.c.l.b16 %v842
    %v961 = vunpack.c.l.b16 %v843
    %v962 = vunpack.c.l.b16 %v844
    %v963 = vunpack.c.l.b16 %v845
    %v964 = vunpack.c.l.b16 %v846
    %v965 = vunpack.c.l.b16 %v847
    %v966 = vpack.c.b16 %v951, %v950
    %v967 = vpack.c.b16 %v953, %v952
    %v968 = vpack.c.b16 %v955, %v954
    %v969 = vpack.c.b16 %v957, %v956
    %v970 = vpack.c.b16 %v959, %v958
    %v971 = vpack.c.b16 %v961, %v960
    %v972 = vpack.c.b16 %v963, %v962
    %v973 = vpack.c.b16 %v965, %v964
    %982 = vmatpush.bf16.msra.mxu0 %v973
    %983 = vmatpush.bf16.msra.mxu0 %v972
    %984 = vmatpush.bf16.msra.mxu0 %v971
    %985 = vmatpush.bf16.msra.mxu0 %v970
    %986 = vmatpush.bf16.msra.mxu0 %v969
    %987 = vmatpush.bf16.msra.mxu0 %v968
    %988 = vmatpush.bf16.msra.mxu0 %v967
    %989 = vmatpush.bf16.msra.mxu0 %v966
    %990 = vmatmul.bf16.gmra.mxu0 %v831
    %v991 = vpop.f32.mrf.mxu0
    %v992 = vadd.f32 %v931, %v991
    %v993 = vpop.f32.mrf.mxu0
    %994 = vdwg.mxu0
    %v995 = vld [vmem:[#allocation2 + $0x4] sm:$0x3]
    %996 = vst [vmem:[#allocation3] sm:$0x3] %v995
    %v997 = vld [vmem:[#allocation2 + $0x8] sm:$0x3]
    %998 = vst [vmem:[#allocation3 + $0x2] sm:$0x3] %v997
    %v999 = vld [vmem:[#allocation2 + $0xc] sm:$0x3]
    %1000 = vst [vmem:[#allocation3 + $0x4] sm:$0x3] %v999
    %v1001 = vld [vmem:[#allocation3] sm:$0x3f]
    %v1002 = vpack.c.bf16 %v1001, %v1001
    %s1003 = scalar_lea.vmem %s3, 128
    %v1004 = vld [vmem:[%s1003] sm:$0xf]
    %v1005 = vld [vmem:[%s1003 + $0x4] sm:$0xf]
    %v1006 = vld [vmem:[%s1003 + $0x8] sm:$0xf]
    %v1007 = vld [vmem:[%s1003 + $0xc] sm:$0xf]
    %v1008 = vld [vmem:[%s1003 + $0x10] sm:$0xf]
    %v1009 = vld [vmem:[%s1003 + $0x14] sm:$0xf]
    %v1010 = vld [vmem:[%s1003 + $0x18] sm:$0xf]
    %v1011 = vld [vmem:[%s1003 + $0x1c] sm:$0xf]
    %v1012 = vld [vmem:[%s1003 + $0x20] sm:$0xf]
    %v1013 = vld [vmem:[%s1003 + $0x24] sm:$0xf]
    %v1014 = vld [vmem:[%s1003 + $0x28] sm:$0xf]
    %v1015 = vld [vmem:[%s1003 + $0x2c] sm:$0xf]
    %v1016 = vld [vmem:[%s1003 + $0x30] sm:$0xf]
    %v1017 = vld [vmem:[%s1003 + $0x34] sm:$0xf]
    %v1018 = vld [vmem:[%s1003 + $0x38] sm:$0xf]
    %v1019 = vld [vmem:[%s1003 + $0x3c] sm:$0xf]
    %v1036 = vunpack.c.l.b16 %v1004
    %v1037 = vunpack.c.l.b16 %v1005
    %v1038 = vunpack.c.l.b16 %v1006
    %v1039 = vunpack.c.l.b16 %v1007
    %v1040 = vunpack.c.l.b16 %v1008
    %v1041 = vunpack.c.l.b16 %v1009
    %v1042 = vunpack.c.l.b16 %v1010
    %v1043 = vunpack.c.l.b16 %v1011
    %v1044 = vunpack.c.l.b16 %v1012
    %v1045 = vunpack.c.l.b16 %v1013
    %v1046 = vunpack.c.l.b16 %v1014
    %v1047 = vunpack.c.l.b16 %v1015
    %v1048 = vunpack.c.l.b16 %v1016
    %v1049 = vunpack.c.l.b16 %v1017
    %v1050 = vunpack.c.l.b16 %v1018
    %v1051 = vunpack.c.l.b16 %v1019
    %v1052 = vpack.c.b16 %v1037, %v1036
    %v1053 = vpack.c.b16 %v1039, %v1038
    %v1054 = vpack.c.b16 %v1041, %v1040
    %v1055 = vpack.c.b16 %v1043, %v1042
    %v1056 = vpack.c.b16 %v1045, %v1044
    %v1057 = vpack.c.b16 %v1047, %v1046
    %v1058 = vpack.c.b16 %v1049, %v1048
    %v1059 = vpack.c.b16 %v1051, %v1050
    %1068 = vmatpush.bf16.msra.mxu0 %v1059
    %1069 = vmatpush.bf16.msra.mxu0 %v1058
    %1070 = vmatpush.bf16.msra.mxu0 %v1057
    %1071 = vmatpush.bf16.msra.mxu0 %v1056
    %1072 = vmatpush.bf16.msra.mxu0 %v1055
    %1073 = vmatpush.bf16.msra.mxu0 %v1054
    %1074 = vmatpush.bf16.msra.mxu0 %v1053
    %1075 = vmatpush.bf16.msra.mxu0 %v1052
    %1076 = vmatmul.bf16.gmra.mxu0 %v1002
    %v1077 = vpop.f32.mrf.mxu0
    %v1078 = vadd.f32 0.0, %v1077
    %v1079 = vpop.f32.mrf.mxu0
    %1080 = vdwg.mxu0
    %v1081 = vadd.f32 %v992, %v1078
    %v1082 = vld [vmem:[#allocation2 + $0x6] sm:$0x3]
    %1083 = vst [vmem:[#allocation3] sm:$0x3] %v1082
    %v1084 = vld [vmem:[#allocation2 + $0xa] sm:$0x3]
    %1085 = vst [vmem:[#allocation3 + $0x2] sm:$0x3] %v1084
    %v1086 = vld [vmem:[#allocation2 + $0xe] sm:$0x3]
    %1087 = vst [vmem:[#allocation3 + $0x4] sm:$0x3] %v1086
    %v1088 = vld [vmem:[#allocation3] sm:$0x3f]
    %v1089 = vpack.c.bf16 %v1088, %v1088
    %s1090 = scalar_lea.vmem %s3, 192
    %v1091 = vld [vmem:[%s1090] sm:$0xf]
    %v1092 = vld [vmem:[%s1090 + $0x4] sm:$0xf]
    %v1093 = vld [vmem:[%s1090 + $0x8] sm:$0xf]
    %v1094 = vld [vmem:[%s1090 + $0xc] sm:$0xf]
    %v1095 = vld [vmem:[%s1090 + $0x10] sm:$0xf]
    %v1096 = vld [vmem:[%s1090 + $0x14] sm:$0xf]
    %v1097 = vld [vmem:[%s1090 + $0x18] sm:$0xf]
    %v1098 = vld [vmem:[%s1090 + $0x1c] sm:$0xf]
    %v1099 = vld [vmem:[%s1090 + $0x20] sm:$0xf]
    %v1100 = vld [vmem:[%s1090 + $0x24] sm:$0xf]
    %v1101 = vld [vmem:[%s1090 + $0x28] sm:$0xf]
    %v1102 = vld [vmem:[%s1090 + $0x2c] sm:$0xf]
    %v1103 = vld [vmem:[%s1090 + $0x30] sm:$0xf]
    %v1104 = vld [vmem:[%s1090 + $0x34] sm:$0xf]
    %v1105 = vld [vmem:[%s1090 + $0x38] sm:$0xf]
    %v1106 = vld [vmem:[%s1090 + $0x3c] sm:$0xf]
    %v1123 = vunpack.c.l.b16 %v1091
    %v1124 = vunpack.c.l.b16 %v1092
    %v1125 = vunpack.c.l.b16 %v1093
    %v1126 = vunpack.c.l.b16 %v1094
    %v1127 = vunpack.c.l.b16 %v1095
    %v1128 = vunpack.c.l.b16 %v1096
    %v1129 = vunpack.c.l.b16 %v1097
    %v1130 = vunpack.c.l.b16 %v1098
    %v1131 = vunpack.c.l.b16 %v1099
    %v1132 = vunpack.c.l.b16 %v1100
    %v1133 = vunpack.c.l.b16 %v1101
    %v1134 = vunpack.c.l.b16 %v1102
    %v1135 = vunpack.c.l.b16 %v1103
    %v1136 = vunpack.c.l.b16 %v1104
    %v1137 = vunpack.c.l.b16 %v1105
    %v1138 = vunpack.c.l.b16 %v1106
    %v1139 = vpack.c.b16 %v1124, %v1123
    %v1140 = vpack.c.b16 %v1126, %v1125
    %v1141 = vpack.c.b16 %v1128, %v1127
    %v1142 = vpack.c.b16 %v1130, %v1129
    %v1143 = vpack.c.b16 %v1132, %v1131
    %v1144 = vpack.c.b16 %v1134, %v1133
    %v1145 = vpack.c.b16 %v1136, %v1135
    %v1146 = vpack.c.b16 %v1138, %v1137
    %1155 = vmatpush.bf16.msra.mxu0 %v1146
    %1156 = vmatpush.bf16.msra.mxu0 %v1145
    %1157 = vmatpush.bf16.msra.mxu0 %v1144
    %1158 = vmatpush.bf16.msra.mxu0 %v1143
    %1159 = vmatpush.bf16.msra.mxu0 %v1142
    %1160 = vmatpush.bf16.msra.mxu0 %v1141
    %1161 = vmatpush.bf16.msra.mxu0 %v1140
    %1162 = vmatpush.bf16.msra.mxu0 %v1139
    %1163 = vmatmul.bf16.gmra.mxu0 %v1089
    %v1164 = vpop.f32.mrf.mxu0
    %v1165 = vadd.f32 0.0, %v1164
    %v1166 = vpop.f32.mrf.mxu0
    %1167 = vdwg.mxu0
    %v1168 = vadd.f32 %v1081, %v1165
    %v1169 = vld [vmem:[%s4] sm:$0x1]
    %v1171 = vperm.slane %v1169, 0
    %v1173 = vadd.f32 %v1168, %v1171
    %v1174 = vmax.f32 %v1173, 0.0
    %vm1175 = vcmask 783360
    %1176 = vst.msk [vmem:[#allocation4] sm:$0x3f] %vm1175, %v1174
    %v1177 = vld [vmem:[#allocation4] sm:$0x3]
    %v1178 = vpack.c.bf16 %v1177, %v1177
    %v1179 = vld [vmem:[%s5] sm:$0xf]
    %v1180 = vld [vmem:[%s5 + $0x4] sm:$0xf]
    %v1181 = vld [vmem:[%s5 + $0x8] sm:$0xf]
    %v1182 = vld [vmem:[%s5 + $0xc] sm:$0xf]
    %v1183 = vld [vmem:[%s5 + $0x10] sm:$0xf]
    %v1184 = vld [vmem:[%s5 + $0x14] sm:$0xf]
    %v1185 = vld [vmem:[%s5 + $0x18] sm:$0xf]
    %v1186 = vld [vmem:[%s5 + $0x1c] sm:$0xf]
    %v1187 = vld [vmem:[%s5 + $0x20] sm:$0xf]
    %v1188 = vld [vmem:[%s5 + $0x24] sm:$0xf]
    %v1189 = vld [vmem:[%s5 + $0x28] sm:$0xf]
    %v1190 = vld [vmem:[%s5 + $0x2c] sm:$0xf]
    %v1191 = vld [vmem:[#allocation4 + $0x2] sm:$0x3]
    %v1192 = vpack.c.bf16 %v1191, %v1191
    %s1193 = scalar_lea.vmem %s5, 48
    %v1194 = vld [vmem:[%s1193] sm:$0xf]
    %v1195 = vld [vmem:[%s1193 + $0x4] sm:$0xf]
    %v1196 = vld [vmem:[%s1193 + $0x8] sm:$0xf]
    %v1197 = vld [vmem:[%s1193 + $0xc] sm:$0xf]
    %v1198 = vld [vmem:[%s1193 + $0x10] sm:$0xf]
    %v1199 = vld [vmem:[%s1193 + $0x14] sm:$0xf]
    %v1200 = vld [vmem:[%s1193 + $0x18] sm:$0xf]
    %v1201 = vld [vmem:[%s1193 + $0x1c] sm:$0xf]
    %v1202 = vld [vmem:[%s1193 + $0x20] sm:$0xf]
    %v1203 = vld [vmem:[%s1193 + $0x24] sm:$0xf]
    %v1204 = vld [vmem:[%s1193 + $0x28] sm:$0xf]
    %v1205 = vld [vmem:[%s1193 + $0x2c] sm:$0xf]
    %v1218 = vunpack.c.l.b16 %v1194
    %v1219 = vunpack.c.l.b16 %v1195
    %v1220 = vunpack.c.l.b16 %v1196
    %v1221 = vunpack.c.l.b16 %v1197
    %v1222 = vunpack.c.l.b16 %v1198
    %v1223 = vunpack.c.l.b16 %v1199
    %v1224 = vunpack.c.l.b16 %v1200
    %v1225 = vunpack.c.l.b16 %v1201
    %v1226 = vunpack.c.l.b16 %v1202
    %v1227 = vunpack.c.l.b16 %v1203
    %v1228 = vunpack.c.l.b16 %v1204
    %v1229 = vunpack.c.l.b16 %v1205
    %v1230 = vpack.c.b16 %v1219, %v1218
    %v1231 = vpack.c.b16 %v1221, %v1220
    %v1232 = vpack.c.b16 %v1223, %v1222
    %v1233 = vpack.c.b16 %v1225, %v1224
    %v1234 = vpack.c.b16 %v1227, %v1226
    %v1235 = vpack.c.b16 %v1229, %v1228
    %vm1242 = vcmask 785408
    %v1244 = vsel %vm1242, %v1192, 0
    %1246 = vmatpush.bf16.msra.mxu0 0
    %1247 = vmatpush.bf16.msra.mxu0 0
    %1248 = vmatpush.bf16.msra.mxu0 %v1235
    %1249 = vmatpush.bf16.msra.mxu0 %v1234
    %1250 = vmatpush.bf16.msra.mxu0 %v1233
    %1251 = vmatpush.bf16.msra.mxu0 %v1232
    %1252 = vmatpush.bf16.msra.mxu0 %v1231
    %1253 = vmatpush.bf16.msra.mxu0 %v1230
    %1254 = vmatmul.bf16.gmra.mxu0 %v1244
    %v1255 = vpop.f32.mrf.mxu0
    %v1256 = vadd.f32 0.0, %v1255
    %v1257 = vpop.f32.mrf.mxu0
    %1258 = vdwg.mxu0
    %v1271 = vunpack.c.l.b16 %v1179
    %v1272 = vunpack.c.l.b16 %v1180
    %v1273 = vunpack.c.l.b16 %v1181
    %v1274 = vunpack.c.l.b16 %v1182
    %v1275 = vunpack.c.l.b16 %v1183
    %v1276 = vunpack.c.l.b16 %v1184
    %v1277 = vunpack.c.l.b16 %v1185
    %v1278 = vunpack.c.l.b16 %v1186
    %v1279 = vunpack.c.l.b16 %v1187
    %v1280 = vunpack.c.l.b16 %v1188
    %v1281 = vunpack.c.l.b16 %v1189
    %v1282 = vunpack.c.l.b16 %v1190
    %v1283 = vpack.c.b16 %v1272, %v1271
    %v1284 = vpack.c.b16 %v1274, %v1273
    %v1285 = vpack.c.b16 %v1276, %v1275
    %v1286 = vpack.c.b16 %v1278, %v1277
    %v1287 = vpack.c.b16 %v1280, %v1279
    %v1288 = vpack.c.b16 %v1282, %v1281
    %v1296 = vsel %vm1242, %v1178, 0
    %1298 = vmatpush.bf16.msra.mxu0 0
    %1299 = vmatpush.bf16.msra.mxu0 0
    %1300 = vmatpush.bf16.msra.mxu0 %v1288
    %1301 = vmatpush.bf16.msra.mxu0 %v1287
    %1302 = vmatpush.bf16.msra.mxu0 %v1286
    %1303 = vmatpush.bf16.msra.mxu0 %v1285
    %1304 = vmatpush.bf16.msra.mxu0 %v1284
    %1305 = vmatpush.bf16.msra.mxu0 %v1283
    %1306 = vmatmul.bf16.gmra.mxu0 %v1296
    %v1307 = vpop.f32.mrf.mxu0
    %v1308 = vadd.f32 %v1256, %v1307
    %v1309 = vpop.f32.mrf.mxu0
    %1310 = vdwg.mxu0
    %v1311 = vld [vmem:[#allocation4 + $0x4] sm:$0x3]
    %v1312 = vpack.c.bf16 %v1311, %v1311
    %s1313 = scalar_lea.vmem %s5, 96
    %v1314 = vld [vmem:[%s1313] sm:$0xf]
    %v1315 = vld [vmem:[%s1313 + $0x4] sm:$0xf]
    %v1316 = vld [vmem:[%s1313 + $0x8] sm:$0xf]
    %v1317 = vld [vmem:[%s1313 + $0xc] sm:$0xf]
    %v1318 = vld [vmem:[%s1313 + $0x10] sm:$0xf]
    %v1319 = vld [vmem:[%s1313 + $0x14] sm:$0xf]
    %v1320 = vld [vmem:[%s1313 + $0x18] sm:$0xf]
    %v1321 = vld [vmem:[%s1313 + $0x1c] sm:$0xf]
    %v1322 = vld [vmem:[%s1313 + $0x20] sm:$0xf]
    %v1323 = vld [vmem:[%s1313 + $0x24] sm:$0xf]
    %v1324 = vld [vmem:[%s1313 + $0x28] sm:$0xf]
    %v1325 = vld [vmem:[%s1313 + $0x2c] sm:$0xf]
    %v1338 = vunpack.c.l.b16 %v1314
    %v1339 = vunpack.c.l.b16 %v1315
    %v1340 = vunpack.c.l.b16 %v1316
    %v1341 = vunpack.c.l.b16 %v1317
    %v1342 = vunpack.c.l.b16 %v1318
    %v1343 = vunpack.c.l.b16 %v1319
    %v1344 = vunpack.c.l.b16 %v1320
    %v1345 = vunpack.c.l.b16 %v1321
    %v1346 = vunpack.c.l.b16 %v1322
    %v1347 = vunpack.c.l.b16 %v1323
    %v1348 = vunpack.c.l.b16 %v1324
    %v1349 = vunpack.c.l.b16 %v1325
    %v1350 = vpack.c.b16 %v1339, %v1338
    %v1351 = vpack.c.b16 %v1341, %v1340
    %v1352 = vpack.c.b16 %v1343, %v1342
    %v1353 = vpack.c.b16 %v1345, %v1344
    %v1354 = vpack.c.b16 %v1347, %v1346
    %v1355 = vpack.c.b16 %v1349, %v1348
    %v1363 = vsel %vm1242, %v1312, 0
    %1365 = vmatpush.bf16.msra.mxu0 0
    %1366 = vmatpush.bf16.msra.mxu0 0
    %1367 = vmatpush.bf16.msra.mxu0 %v1355
    %1368 = vmatpush.bf16.msra.mxu0 %v1354
    %1369 = vmatpush.bf16.msra.mxu0 %v1353
    %1370 = vmatpush.bf16.msra.mxu0 %v1352
    %1371 = vmatpush.bf16.msra.mxu0 %v1351
    %1372 = vmatpush.bf16.msra.mxu0 %v1350
    %1373 = vmatmul.bf16.gmra.mxu0 %v1363
    %v1374 = vpop.f32.mrf.mxu0
    %v1375 = vadd.f32 0.0, %v1374
    %v1376 = vpop.f32.mrf.mxu0
    %1377 = vdwg.mxu0
    %v1378 = vadd.f32 %v1308, %v1375
    %v1379 = vld [vmem:[%s6] sm:$0x1]
    %v1381 = vperm.slane %v1379, 0
    %v1383 = vadd.f32 %v1378, %v1381
    %v1384 = vmax.f32 %v1383, 0.0
    %v1385 = vpack.c.bf16 %v1384, %v1384
    %v1386 = vld [vmem:[%s7] sm:$0xf]
    %v1387 = vld [vmem:[%s7 + $0x4] sm:$0xf]
    %v1388 = vld [vmem:[%s7 + $0x8] sm:$0xf]
    %v1389 = vld [vmem:[%s7 + $0xc] sm:$0xf]
    %v1390 = vld [vmem:[%s8] sm:$0x1]
    %v1392 = vperm.slane %v1390, 0
    %v1398 = vunpack.c.l.b16 %v1386
    %v1399 = vunpack.c.l.b16 %v1387
    %v1400 = vunpack.c.l.b16 %v1388
    %v1401 = vunpack.c.l.b16 %v1389
    %v1402 = vpack.c.b16 %v1399, %v1398
    %v1403 = vpack.c.b16 %v1401, %v1400
    %vm1406 = vcmask 261120
    %v1408 = vsel %vm1406, %v1385, 0
    %1410 = vmatpush.bf16.msra.mxu0 0
    %1411 = vmatpush.bf16.msra.mxu0 0
    %1412 = vmatpush.bf16.msra.mxu0 0
    %1413 = vmatpush.bf16.msra.mxu0 0
    %1414 = vmatpush.bf16.msra.mxu0 0
    %1415 = vmatpush.bf16.msra.mxu0 0
    %1416 = vmatpush.bf16.msra.mxu0 %v1403
    %1417 = vmatpush.bf16.msra.mxu0 %v1402
    %1418 = vmatmul.bf16.gmra.mxu0 %v1408
    %v1419 = vpop.f32.mrf.mxu0
    %v1420 = vadd.f32 %v1392, %v1419
    %v1421 = vpop.f32.mrf.mxu0
    %1422 = vdwg.mxu0
    %vm1423 = vcmask 1041408
    %v1424 = vsel %vm1423, %v1420, 0.0
    %1425 = vadd.xlane.f32.xlu0 %v1424
    %v1426 = vpop.xlane.xlu0 %1425
    %v1427 = vrcp.pop 128.0
    %v1428 = vmul.f32 128.0, %v1427
    %v1429 = vsub.f32 1.0, %v1428
    %v1430 = vmul.f32 %v1427, %v1429
    %v1431 = vadd.f32 %v1427, %v1430
    %vm1432 = vweird.f32 %v1427
    %v1433 = vsel %vm1432, %v1427, %v1431
    %v1434 = vmul.f32 %v1426, %v1433
    %v1435 = vsub.f32 %v1420, %v1434
    %v1436 = vmul.f32 %v1435, %v1435
    %v1437 = vsel %vm1423, %v1436, 0.0
    %1438 = vadd.xlane.f32.xlu0 %v1437
    %v1439 = vpop.xlane.xlu0 %1438
    %v1440 = vmul.f32 %v1439, %v1433
    %v1441 = vadd.f32 %v1440, 1e-05
    %v1442 = vrsqrt.pop %v1441
    %v1443 = vmul.f32 %v1442, %v1441
    %v1444 = vmul.f32 %v1443, %v1442
    %v1445 = vmul.f32 0.5, %v1444
    %v1446 = vsub.f32 1.5, %v1445
    %v1447 = vmul.f32 %v1442, %v1446
    %vm1448 = vweird.f32 %v1441
    %vm1449 = vweird.f32 %v1442
    %vm1450 = vmor %vm1448, %vm1449
    %v1451 = vsel %vm1450, %v1442, %v1447
    %v1452 = vmul.f32 %v1435, %v1451
    %v1453 = vld [vmem:[%s9] sm:$0x1]
    %v1455 = vperm.slane %v1453, 0
    %v1457 = vmul.f32 %v1452, %v1455
    %v1458 = vld [vmem:[%s10] sm:$0x1]
    %v1460 = vperm.slane %v1458, 0
    %v1462 = vadd.f32 %v1457, %v1460
    %v1463 = vmax.f32 %v1462, 0.0
    %v1464 = vpack.c.bf16 %v1463, %v1463
    %v1465 = vld [vmem:[%s11] sm:$0xf]
    %v1466 = vld [vmem:[%s11 + $0x4] sm:$0xf]
    %v1467 = vld [vmem:[%s11 + $0x8] sm:$0xf]
    %v1468 = vld [vmem:[%s11 + $0xc] sm:$0xf]
    %v1469 = vld [vmem:[%s11 + $0x10] sm:$0xf]
    %v1470 = vld [vmem:[%s11 + $0x14] sm:$0xf]
    %v1471 = vld [vmem:[%s11 + $0x18] sm:$0xf]
    %v1472 = vld [vmem:[%s11 + $0x1c] sm:$0xf]
    %v1473 = vld [vmem:[%s11 + $0x20] sm:$0xf]
    %v1474 = vld [vmem:[%s11 + $0x24] sm:$0xf]
    %v1475 = vld [vmem:[%s11 + $0x28] sm:$0xf]
    %v1476 = vld [vmem:[%s11 + $0x2c] sm:$0xf]
    %v1477 = vld [vmem:[%s11 + $0x30] sm:$0xf]
    %v1478 = vld [vmem:[%s11 + $0x34] sm:$0xf]
    %v1479 = vld [vmem:[%s11 + $0x38] sm:$0xf]
    %v1480 = vld [vmem:[%s11 + $0x3c] sm:$0xf]
    %v1481 = vld [vmem:[%s12] sm:$0x1]
    %v1483 = vperm.slane %v1481, 0
    %v1501 = vunpack.c.l.b16 %v1465
    %v1502 = vunpack.c.l.b16 %v1466
    %v1503 = vunpack.c.l.b16 %v1467
    %v1504 = vunpack.c.l.b16 %v1468
    %v1505 = vunpack.c.l.b16 %v1469
    %v1506 = vunpack.c.l.b16 %v1470
    %v1507 = vunpack.c.l.b16 %v1471
    %v1508 = vunpack.c.l.b16 %v1472
    %v1509 = vunpack.c.l.b16 %v1473
    %v1510 = vunpack.c.l.b16 %v1474
    %v1511 = vunpack.c.l.b16 %v1475
    %v1512 = vunpack.c.l.b16 %v1476
    %v1513 = vunpack.c.l.b16 %v1477
    %v1514 = vunpack.c.l.b16 %v1478
    %v1515 = vunpack.c.l.b16 %v1479
    %v1516 = vunpack.c.l.b16 %v1480
    %v1517 = vpack.c.b16 %v1502, %v1501
    %v1518 = vpack.c.b16 %v1504, %v1503
    %v1519 = vpack.c.b16 %v1506, %v1505
    %v1520 = vpack.c.b16 %v1508, %v1507
    %v1521 = vpack.c.b16 %v1510, %v1509
    %v1522 = vpack.c.b16 %v1512, %v1511
    %v1523 = vpack.c.b16 %v1514, %v1513
    %v1524 = vpack.c.b16 %v1516, %v1515
    %1533 = vmatpush.bf16.msra.mxu0 %v1524
    %1534 = vmatpush.bf16.msra.mxu0 %v1523
    %1535 = vmatpush.bf16.msra.mxu0 %v1522
    %1536 = vmatpush.bf16.msra.mxu0 %v1521
    %1537 = vmatpush.bf16.msra.mxu0 %v1520
    %1538 = vmatpush.bf16.msra.mxu0 %v1519
    %1539 = vmatpush.bf16.msra.mxu0 %v1518
    %1540 = vmatpush.bf16.msra.mxu0 %v1517
    %1541 = vmatmul.bf16.gmra.mxu0 %v1464
    %v1542 = vpop.f32.mrf.mxu0
    %v1543 = vadd.f32 %v1483, %v1542
    %v1544 = vpop.f32.mrf.mxu0
    %1545 = vdwg.mxu0
    %v1546 = vsel %vm1423, %v1543, 0.0
    %1547 = vadd.xlane.f32.xlu0 %v1546
    %v1548 = vpop.xlane.xlu0 %1547
    %v1549 = vmul.f32 %v1548, %v1433
    %v1550 = vsub.f32 %v1543, %v1549
    %v1551 = vmul.f32 %v1550, %v1550
    %v1552 = vsel %vm1423, %v1551, 0.0
    %1553 = vadd.xlane.f32.xlu0 %v1552
    %v1554 = vpop.xlane.xlu0 %1553
    %v1555 = vmul.f32 %v1554, %v1433
    %v1556 = vadd.f32 %v1555, 1e-05
    %v1557 = vrsqrt.pop %v1556
    %v1558 = vmul.f32 %v1557, %v1556
    %v1559 = vmul.f32 %v1558, %v1557
    %v1560 = vmul.f32 0.5, %v1559
    %v1561 = vsub.f32 1.5, %v1560
    %v1562 = vmul.f32 %v1557, %v1561
    %vm1563 = vweird.f32 %v1556
    %vm1564 = vweird.f32 %v1557
    %vm1565 = vmor %vm1563, %vm1564
    %v1566 = vsel %vm1565, %v1557, %v1562
    %v1567 = vmul.f32 %v1550, %v1566
    %v1568 = vld [vmem:[%s13] sm:$0x1]
    %v1570 = vperm.slane %v1568, 0
    %v1572 = vmul.f32 %v1567, %v1570
    %v1573 = vld [vmem:[%s14] sm:$0x1]
    %v1575 = vperm.slane %v1573, 0
    %v1577 = vadd.f32 %v1572, %v1575
    %v1578 = vmax.f32 %v1577, 0.0
    %v1579 = vpack.c.bf16 %v1578, %v1578
    %v1580 = vld [vmem:[%s15] sm:$0xf]
    %v1581 = vld [vmem:[%s15 + $0x4] sm:$0xf]
    %v1582 = vld [vmem:[%s15 + $0x8] sm:$0xf]
    %v1583 = vld [vmem:[%s15 + $0xc] sm:$0xf]
    %v1584 = vld [vmem:[%s15 + $0x10] sm:$0xf]
    %v1585 = vld [vmem:[%s15 + $0x14] sm:$0xf]
    %v1586 = vld [vmem:[%s15 + $0x18] sm:$0xf]
    %v1587 = vld [vmem:[%s15 + $0x1c] sm:$0xf]
    %v1588 = vld [vmem:[%s15 + $0x20] sm:$0xf]
    %v1589 = vld [vmem:[%s15 + $0x24] sm:$0xf]
    %v1590 = vld [vmem:[%s15 + $0x28] sm:$0xf]
    %v1591 = vld [vmem:[%s15 + $0x2c] sm:$0xf]
    %v1592 = vld [vmem:[%s15 + $0x30] sm:$0xf]
    %v1593 = vld [vmem:[%s15 + $0x34] sm:$0xf]
    %v1594 = vld [vmem:[%s15 + $0x38] sm:$0xf]
    %v1595 = vld [vmem:[%s15 + $0x3c] sm:$0xf]
    %v1596 = vld [vmem:[%s16] sm:$0x1]
    %v1598 = vperm.slane %v1596, 0
    %v1616 = vunpack.c.l.b16 %v1580
    %v1617 = vunpack.c.l.b16 %v1581
    %v1618 = vunpack.c.l.b16 %v1582
    %v1619 = vunpack.c.l.b16 %v1583
    %v1620 = vunpack.c.l.b16 %v1584
    %v1621 = vunpack.c.l.b16 %v1585
    %v1622 = vunpack.c.l.b16 %v1586
    %v1623 = vunpack.c.l.b16 %v1587
    %v1624 = vunpack.c.l.b16 %v1588
    %v1625 = vunpack.c.l.b16 %v1589
    %v1626 = vunpack.c.l.b16 %v1590
    %v1627 = vunpack.c.l.b16 %v1591
    %v1628 = vunpack.c.l.b16 %v1592
    %v1629 = vunpack.c.l.b16 %v1593
    %v1630 = vunpack.c.l.b16 %v1594
    %v1631 = vunpack.c.l.b16 %v1595
    %v1632 = vpack.c.b16 %v1617, %v1616
    %v1633 = vpack.c.b16 %v1619, %v1618
    %v1634 = vpack.c.b16 %v1621, %v1620
    %v1635 = vpack.c.b16 %v1623, %v1622
    %v1636 = vpack.c.b16 %v1625, %v1624
    %v1637 = vpack.c.b16 %v1627, %v1626
    %v1638 = vpack.c.b16 %v1629, %v1628
    %v1639 = vpack.c.b16 %v1631, %v1630
    %1648 = vmatpush.bf16.msra.mxu0 %v1639
    %1649 = vmatpush.bf16.msra.mxu0 %v1638
    %1650 = vmatpush.bf16.msra.mxu0 %v1637
    %1651 = vmatpush.bf16.msra.mxu0 %v1636
    %1652 = vmatpush.bf16.msra.mxu0 %v1635
    %1653 = vmatpush.bf16.msra.mxu0 %v1634
    %1654 = vmatpush.bf16.msra.mxu0 %v1633
    %1655 = vmatpush.bf16.msra.mxu0 %v1632
    %1656 = vmatmul.bf16.gmra.mxu0 %v1579
    %v1657 = vpop.f32.mrf.mxu0
    %v1658 = vadd.f32 %v1598, %v1657
    %v1659 = vpop.f32.mrf.mxu0
    %1660 = vdwg.mxu0
    %v1661 = vtanh.pop %v1658
    %vm1662 = vcmask 25600
    %1663 = vst.msk [vmem:[#allocation6] sm:$0x3] %vm1662, %v1661
    // Predicated region
    $region70: #{forward.1} parent=1 // pred_check
      _
    $region71: #{forward.1} parent=1 // pred_check_branch
      %1665 = sbr.rel (0) target = $region73
    $region72: #{forward.1} parent=1 // pred_region
      %1667 = vsyncadd [#allocation7], 0
      %s1669 = sshll.u32 [#allocation6], 4
      %s1670 = int_to_ptr.vmem [resolvable:$true] %s1669
      %s1671 = sshll.u32 %s17, 4
      %s1672 = int_to_ptr.hbm [resolvable:$true] %s1671
      %1674 = dma.vmem_to_hbm [thread:$0]  %s1670, 32, %s1672, [#allocation7]
    $region73: #{forward.1} parent=1 // pred_fallthru
      _
    // Predicated region
    $region74: #{forward.1} parent=1 // pred_check
      _
    $region75: #{forward.1} parent=1 // pred_check_branch
      %1676 = sbr.rel (0) target = $region77
    $region76: #{forward.1} parent=1 // pred_region
      %1678 = dma.done [#allocation7], 32
    $region77: #{forward.1} parent=1 // pred_fallthru
      _
    %1679 = vsyncpa [#allocation7], 1

</llo_original>
